<compile_context>
chip_gen: v7x
topology: tpu7x:2x2x1
jax: 0.10.0
libtpu: 0.0.40
codegen_flags: <defaults>
</compile_context>

<pallas_src>
import functools

import jax
import jax.numpy as jnp
from jax.experimental import pallas as pl
from jax.experimental.pallas import tpu as pltpu

_LANES = 128


def _round_up(x, m):
    return ((x + m - 1) // m) * m


def _default_num_splits():
    # 2 TensorCores per chip only on v7x; one "parallel" split per core.
    try:
        kind = jax.devices()[0].device_kind.lower()
        if "v7" in kind or "7x" in kind:
            return 2
    except Exception:
        pass
    return 1


def _ece_stats_kernel(logits_ref, labels_ref, cnt_ref, confsum_ref, *,
                      n_bins, n_rows, n_valid, tm, blocks_per_split):
    """Per-split partial bin statistics.

    logits_ref : (C, tm)  native dtype, classes on sublanes, samples on lanes
    labels_ref : (1, tm)  int32
    cnt_ref    : (n_rows, 128) f32 output block (resident accumulator)
    confsum_ref: (n_rows, 128) f32 output block (resident accumulator)
    """
    s_id = pl.program_id(0)
    b_id = pl.program_id(1)

    @pl.when(b_id == 0)
    def _init():
        cnt_ref[...] = jnp.zeros_like(cnt_ref)
        confsum_ref[...] = jnp.zeros_like(confsum_ref)

    # ---- per-sample softmax statistics (all lane-dense) -------------------
    x = logits_ref[...].astype(jnp.float32)                   # (C, tm)
    num_classes = x.shape[0]

    m = jnp.max(x, axis=0, keepdims=True)                     # (1, tm)
    e = jnp.exp(x - m)                                        # EUP
    ssum = jnp.sum(e, axis=0, keepdims=True)                  # (1, tm)

    # confidence = max softmax prob = 1 / sum(exp(x - m)); approx reciprocal
    # (EUP slot, nearly free) + one Newton-Raphson step restores f32 accuracy
    # so bin assignments do not move.
    r = pl.reciprocal(ssum, approx=True)
    conf = r * (2.0 - ssum * r)                                # (1, tm)

    # argmax with first-index tie-break (matches torch.max), done in f32.
    cls = jax.lax.broadcasted_iota(jnp.int32, x.shape, 0).astype(jnp.float32)
    pred = jnp.min(jnp.where(x == m, cls, jnp.float32(num_classes)),
                   axis=0, keepdims=True)                      # (1, tm)
    acc = pred == labels_ref[...].astype(jnp.float32)          # (1, tm) bool

    # bin k covers (k/n_bins, (k+1)/n_bins]  ->  k = ceil(conf * n_bins) - 1
    bin_idx = jnp.ceil(conf * jnp.float32(n_bins)).astype(jnp.int32) - 1
    bin_idx = jnp.clip(bin_idx, 0, n_bins - 1)                 # (1, tm)

    # accuracy encoded into the code: rows [0,n_bins) wrong, [n_bins,2n_bins)
    # correct -> only two accumulated quantities (count, conf-sum) needed.
    code = bin_idx + n_bins * acc.astype(jnp.int32)            # (1, tm)

    # padded (out-of-range) samples go to the unused "dead" row 2*n_bins.
    lane = jax.lax.broadcasted_iota(jnp.int32, (1, tm), 1)
    gidx = (s_id * blocks_per_split + b_id) * tm + lane
    code = jnp.where(gidx < n_valid, code, 2 * n_bins)

    # sublane one-hot (rows = code, lanes = samples); reduce over lanes and
    # broadcast-add the (n_rows, 1) partial into the resident output block.
    rows = jax.lax.broadcasted_iota(jnp.int32, (n_rows, tm), 0)
    hot = rows == code                                         # (n_rows, tm)
    cnt_ref[...] += jnp.sum(hot.astype(jnp.float32), axis=1, keepdims=True)
    confsum_ref[...] += jnp.sum(jnp.where(hot, conf, 0.0), axis=1,
                                keepdims=True)


def ece_loss(logits, labels, n_bins=15, num_splits=None, max_tm=2048):
    """Returns ECE as a (1,) float32 array, matching the torch module."""
    n, c = logits.shape
    assert n_bins >= 1
    if num_splits is None:
        num_splits = _default_num_splits()
    num_splits = max(1, int(num_splits))

    # rows: [0,n_bins) wrong, [n_bins,2*n_bins) correct, 2*n_bins dead (pad).
    n_rows = _round_up(2 * n_bins + 1, 8)

    # VMEM accounting with sublane/lane padding: the (c, tm) block pads c to
    # the dtype's sublane packing and the (1, tm) labels block pads to 8
    # sublanes of int32; both are double-buffered.
    itemsize = jnp.dtype(logits.dtype).itemsize
    sub_pack = max(1, 4 // itemsize) * 8          # 8 for f32, 16 for bf16, ...
    c_padded = _round_up(c, sub_pack)
    budget = 20 * 1024 * 1024
    bytes_per_lane = 2 * c_padded * itemsize + 2 * 8 * 4
    tm_budget = max(_LANES, (budget // bytes_per_lane) // _LANES * _LANES)

    tm = min(max_tm, tm_budget, _round_up(max(1, -(-n // num_splits)), _LANES))
    tm = max(_LANES, (tm // _LANES) * _LANES)
    blocks_per_split = -(-n // (num_splits * tm))
    n_pad = num_splits * blocks_per_split * tm

    # (C, N) layout: classes on sublanes, samples on lanes.  Native dtype is
    # passed through (no wrapper f32 cast); padding columns are zeros and are
    # masked out inside the kernel.
    logits_t = jnp.transpose(logits)                           # (C, N)
    labels2d = labels.reshape(1, n).astype(jnp.int32)          # (1, N)
    if n_pad != n:
        logits_t = jnp.pad(logits_t, ((0, 0), (0, n_pad - n)))
        labels2d = jnp.pad(labels2d, ((0, 0), (0, n_pad - n)))

    kernel = functools.partial(
        _ece_stats_kernel, n_bins=n_bins, n_rows=n_rows, n_valid=n, tm=tm,
        blocks_per_split=blocks_per_split)

    cnt, confsum = pl.pallas_call(
        kernel,
        out_shape=(
            jax.ShapeDtypeStruct((num_splits, n_rows, _LANES), jnp.float32),
            jax.ShapeDtypeStruct((num_splits, n_rows, _LANES), jnp.float32),
        ),
        grid_spec=pltpu.PrefetchScalarGridSpec(
            num_scalar_prefetch=0,
            grid=(num_splits, blocks_per_split),
            in_specs=[
                pl.BlockSpec((c, tm),
                             lambda s, b: (0, s * blocks_per_split + b)),
                pl.BlockSpec((1, tm),
                             lambda s, b: (0, s * blocks_per_split + b)),
            ],
            out_specs=[
                pl.BlockSpec((None, n_rows, _LANES), lambda s, b: (s, 0, 0)),
                pl.BlockSpec((None, n_rows, _LANES), lambda s, b: (s, 0, 0)),
            ],
        ),
        compiler_params=pltpu.CompilerParams(
            dimension_semantics=("parallel", "arbitrary"),
            vmem_limit_bytes=32 * 1024 * 1024,
        ),
    )(logits_t, labels2d)

    # Tiny epilogue: every lane of the output blocks holds the same value
    # (broadcast accumulation), so read lane 0, combine splits, decode the
    # accuracy encoding, and form the ECE scalar.
    cnt_tot = jnp.sum(cnt[:, :, 0], axis=0)                    # (n_rows,)
    conf_tot = jnp.sum(confsum[:, :, 0], axis=0)
    cnt_bin = cnt_tot[:n_bins] + cnt_tot[n_bins:2 * n_bins]
    acc_bin = cnt_tot[n_bins:2 * n_bins]        # acc-sum == count of correct
    conf_bin = conf_tot[:n_bins] + conf_tot[n_bins:2 * n_bins]

    prop = cnt_bin / jnp.float32(n)
    safe = jnp.where(cnt_bin > 0, cnt_bin, 1.0)
    gap = jnp.where(cnt_bin > 0,
                    jnp.abs(conf_bin / safe - acc_bin / safe) * prop, 0.0)
    return jnp.sum(gap).reshape(1)


def ece_reference(logits, labels, n_bins=15):
    """Pure-JAX reference mirroring the torch forward."""
    softmaxes = jax.nn.softmax(logits.astype(jnp.float32), axis=1)
    confidences = jnp.max(softmaxes, axis=1)
    predictions = jnp.argmax(softmaxes, axis=1)
    accuracies = (predictions == labels).astype(jnp.float32)
    boundaries = jnp.linspace(0.0, 1.0, n_bins + 1)
    ece = jnp.zeros((1,), jnp.float32)
    for b in range(n_bins):
        lo, hi = boundaries[b], boundaries[b + 1]
        in_bin = jnp.logical_and(confidences > lo, confidences <= hi)
        prop = jnp.mean(in_bin.astype(jnp.float32))
        cnt = jnp.sum(in_bin.astype(jnp.float32))
        safe = jnp.where(cnt > 0, cnt, 1.0)
        acc_in = jnp.sum(jnp.where(in_bin, accuracies, 0.0)) / safe
        conf_in = jnp.sum(jnp.where(in_bin, confidences, 0.0)) / safe
        ece = ece + jnp.where(cnt > 0, jnp.abs(conf_in - acc_in) * prop, 0.0)
    return ece


if __name__ == "__main__":
    key = jax.random.PRNGKey(0)
    k1, k2 = jax.random.split(key)
    N, C = 2048, 16
    logits = 3.0 * jax.random.normal(k1, (N, C), dtype=jnp.float32)
    labels = jax.random.randint(k2, (N,), 0, C, dtype=jnp.int32)

    ece = jax.block_until_ready(ece_loss(logits, labels, n_bins=15))
    ref = jax.block_until_ready(ece_reference(logits, labels, n_bins=15))

    assert ece.shape == (1,)
    assert jnp.allclose(ece, ref, atol=1e-5, rtol=1e-5), (ece, ref)
    print("KERNEL_OK")
</pallas_src>

<mosaic_0001>
module attributes {stable_mosaic.version = 11 : i64} {
  func.func @_ece_stats_kernel(%arg0: i32, %arg1: i32, %arg2: memref<16x2048xf32, #tpu.memory_space<vmem>>, %arg3: memref<1x2048xi32, #tpu.memory_space<vmem>>, %arg4: memref<1x32x128xf32, #tpu.memory_space<vmem>>, %arg5: memref<1x32x128xf32, #tpu.memory_space<vmem>>) attributes {dimension_semantics = [#tpu.dimension_semantics<parallel>, #tpu.dimension_semantics<arbitrary>], iteration_bounds = array<i64: 1, 1>, scalar_prefetch = 0 : i64, scratch_operands = 0 : i64, tpu.core_type = #tpu.core_type<tc>, window_params = [{transform_indices = @transform_0, window_bounds = array<i64: 16, 2048>}, {transform_indices = @transform_1, window_bounds = array<i64: 1, 2048>}, {transform_indices = @transform_2, window_bounds = array<i64: 1, 32, 128>}, {transform_indices = @transform_3, window_bounds = array<i64: 1, 32, 128>}]} {
    %c0_i32 = arith.constant 0 : i32
    %0 = arith.cmpi eq, %arg1, %c0_i32 : i32
    %1 = arith.extui %0 : i1 to i32
    %c0_i32_0 = arith.constant 0 : i32
    %2 = arith.cmpi ne, %1, %c0_i32_0 : i32
    scf.if %2 {
      %cst_27 = arith.constant 0.000000e+00 : f32
      %78 = vector.broadcast %cst_27 : f32 to vector<32x128xf32>
      %c0_28 = arith.constant 0 : index
      %c0_29 = arith.constant 0 : index
      %c0_30 = arith.constant 0 : index
      %79 = vector.load %arg4[%c0_28, %c0_29, %c0_30] : memref<1x32x128xf32, #tpu.memory_space<vmem>>, vector<1x32x128xf32>
      %80 = vector.shape_cast %79 : vector<1x32x128xf32> to vector<32x128xf32>
      %81 = vector.shape_cast %78 : vector<32x128xf32> to vector<1x32x128xf32>
      tpu.vector_store %arg4[%c0_28, %c0_29, %c0_30], %81 {strides = array<i32>} : memref<1x32x128xf32, #tpu.memory_space<vmem>>, vector<1x32x128xf32>,
      %cst_31 = arith.constant 0.000000e+00 : f32
      %82 = vector.broadcast %cst_31 : f32 to vector<32x128xf32>
      %c0_32 = arith.constant 0 : index
      %c0_33 = arith.constant 0 : index
      %c0_34 = arith.constant 0 : index
      %83 = vector.load %arg5[%c0_32, %c0_33, %c0_34] : memref<1x32x128xf32, #tpu.memory_space<vmem>>, vector<1x32x128xf32>
      %84 = vector.shape_cast %83 : vector<1x32x128xf32> to vector<32x128xf32>
      %85 = vector.shape_cast %82 : vector<32x128xf32> to vector<1x32x128xf32>
      tpu.vector_store %arg5[%c0_32, %c0_33, %c0_34], %85 {strides = array<i32>} : memref<1x32x128xf32, #tpu.memory_space<vmem>>, vector<1x32x128xf32>,
    } else {
    }
    %c0 = arith.constant 0 : index
    %c0_1 = arith.constant 0 : index
    %3 = vector.load %arg2[%c0, %c0_1] : memref<16x2048xf32, #tpu.memory_space<vmem>>, vector<16x2048xf32>
    %cst = arith.constant dense<0xFF800000> : vector<2048xf32>
    %4 = vector.multi_reduction <maximumf>, %3, %cst [0] : vector<16x2048xf32> to vector<2048xf32>
    %5 = vector.shape_cast %4 : vector<2048xf32> to vector<1x2048xf32>
    %6 = vector.broadcast %5 : vector<1x2048xf32> to vector<16x2048xf32>
    %7 = arith.subf %3, %6 : vector<16x2048xf32>
    %8 = math.exp %7 : vector<16x2048xf32>
    %cst_2 = arith.constant dense<0.000000e+00> : vector<2048xf32>
    %9 = vector.multi_reduction <add>, %8, %cst_2 [0] : vector<16x2048xf32> to vector<2048xf32>
    %10 = vector.shape_cast %9 : vector<2048xf32> to vector<1x2048xf32>
    %11 = tpu.reciprocal %10 {approx = true} : vector<1x2048xf32> -> vector<1x2048xf32>
    %12 = arith.mulf %10, %11 : vector<1x2048xf32>
    %cst_3 = arith.constant 2.000000e+00 : f32
    %13 = vector.broadcast %cst_3 : f32 to vector<1x2048xf32>
    %14 = arith.subf %13, %12 : vector<1x2048xf32>
    %15 = arith.mulf %11, %14 : vector<1x2048xf32>
    %16 = tpu.iota {dimensions = array<i32: 0>} : vector<16x2048xi32>
    %17 = arith.sitofp %16 : vector<16x2048xi32> to vector<16x2048xf32>
    %18 = vector.broadcast %5 : vector<1x2048xf32> to vector<16x2048xf32>
    %19 = arith.cmpf oeq, %3, %18 : vector<16x2048xf32>
    %cst_4 = arith.constant 1.600000e+01 : f32
    %20 = vector.broadcast %cst_4 : f32 to vector<16x2048xf32>
    %21 = arith.select %19, %17, %20 : vector<16x2048xi1>, vector<16x2048xf32>
    %cst_5 = arith.constant dense<0x7F800000> : vector<2048xf32>
    %22 = vector.multi_reduction <minimumf>, %21, %cst_5 [0] : vector<16x2048xf32> to vector<2048xf32>
    %23 = vector.shape_cast %22 : vector<2048xf32> to vector<1x2048xf32>
    %c0_6 = arith.constant 0 : index
    %c0_7 = arith.constant 0 : index
    %24 = vector.load %arg3[%c0_6, %c0_7] : memref<1x2048xi32, #tpu.memory_space<vmem>>, vector<1x2048xi32>
    %25 = arith.sitofp %24 : vector<1x2048xi32> to vector<1x2048xf32>
    %26 = arith.cmpf oeq, %23, %25 : vector<1x2048xf32>
    %cst_8 = arith.constant 1.500000e+01 : f32
    %27 = vector.broadcast %cst_8 : f32 to vector<1x2048xf32>
    %28 = arith.mulf %15, %27 : vector<1x2048xf32>
    %29 = math.ceil %28 : vector<1x2048xf32>
    %30 = arith.fptosi %29 : vector<1x2048xf32> to vector<1x2048xi32>
    %c1_i32 = arith.constant 1 : i32
    %31 = vector.broadcast %c1_i32 : i32 to vector<1x2048xi32>
    %32 = arith.subi %30, %31 : vector<1x2048xi32>
    %c0_i32_9 = arith.constant 0 : i32
    %c14_i32 = arith.constant 14 : i32
    %33 = vector.broadcast %c0_i32_9 : i32 to vector<1x2048xi32>
    %34 = arith.maxsi %33, %32 : vector<1x2048xi32>
    %35 = vector.broadcast %c14_i32 : i32 to vector<1x2048xi32>
    %36 = arith.minsi %35, %34 : vector<1x2048xi32>
    %37 = arith.extui %26 : vector<1x2048xi1> to vector<1x2048xi32>
    %c15_i32 = arith.constant 15 : i32
    %38 = vector.broadcast %c15_i32 : i32 to vector<1x2048xi32>
    %39 = arith.muli %38, %37 : vector<1x2048xi32>
    %40 = arith.addi %36, %39 : vector<1x2048xi32>
    %41 = tpu.iota {dimensions = array<i32: 1>} : vector<1x2048xi32>
    %c1_i32_10 = arith.constant 1 : i32
    %42 = arith.muli %arg0, %c1_i32_10 : i32
    %43 = arith.addi %42, %arg1 : i32
    %c2048_i32 = arith.constant 2048 : i32
    %44 = arith.muli %43, %c2048_i32 : i32
    %45 = vector.broadcast %44 : i32 to vector<1x2048xi32>
    %46 = arith.addi %45, %41 : vector<1x2048xi32>
    %c2048_i32_11 = arith.constant 2048 : i32
    %47 = vector.broadcast %c2048_i32_11 : i32 to vector<1x2048xi32>
    %48 = arith.cmpi slt, %46, %47 : vector<1x2048xi32>
    %c30_i32 = arith.constant 30 : i32
    %49 = vector.broadcast %c30_i32 : i32 to vector<1x2048xi32>
    %50 = arith.select %48, %40, %49 : vector<1x2048xi1>, vector<1x2048xi32>
    %51 = tpu.iota {dimensions = array<i32: 0>} : vector<32x2048xi32>
    %52 = vector.broadcast %50 : vector<1x2048xi32> to vector<32x2048xi32>
    %53 = arith.cmpi eq, %51, %52 : vector<32x2048xi32>
    %c0_12 = arith.constant 0 : index
    %c0_13 = arith.constant 0 : index
    %c0_14 = arith.constant 0 : index
    %54 = vector.load %arg4[%c0_12, %c0_13, %c0_14] : memref<1x32x128xf32, #tpu.memory_space<vmem>>, vector<1x32x128xf32>
    %55 = vector.shape_cast %54 : vector<1x32x128xf32> to vector<32x128xf32>
    %56 = arith.extui %53 : vector<32x2048xi1> to vector<32x2048xi32>
    %57 = arith.sitofp %56 : vector<32x2048xi32> to vector<32x2048xf32>
    %cst_15 = arith.constant dense<0.000000e+00> : vector<32xf32>
    %58 = vector.multi_reduction <add>, %57, %cst_15 [1] : vector<32x2048xf32> to vector<32xf32>
    %59 = vector.shape_cast %58 : vector<32xf32> to vector<32x1xf32>
    %60 = vector.broadcast %59 : vector<32x1xf32> to vector<32x128xf32>
    %61 = arith.addf %55, %60 : vector<32x128xf32>
    %c0_16 = arith.constant 0 : index
    %c0_17 = arith.constant 0 : index
    %c0_18 = arith.constant 0 : index
    %62 = vector.load %arg4[%c0_16, %c0_17, %c0_18] : memref<1x32x128xf32, #tpu.memory_space<vmem>>, vector<1x32x128xf32>
    %63 = vector.shape_cast %62 : vector<1x32x128xf32> to vector<32x128xf32>
    %64 = vector.shape_cast %61 : vector<32x128xf32> to vector<1x32x128xf32>
    tpu.vector_store %arg4[%c0_16, %c0_17, %c0_18], %64 {strides = array<i32>} : memref<1x32x128xf32, #tpu.memory_space<vmem>>, vector<1x32x128xf32>,
    %c0_19 = arith.constant 0 : index
    %c0_20 = arith.constant 0 : index
    %c0_21 = arith.constant 0 : index
    %65 = vector.load %arg5[%c0_19, %c0_20, %c0_21] : memref<1x32x128xf32, #tpu.memory_space<vmem>>, vector<1x32x128xf32>
    %66 = vector.shape_cast %65 : vector<1x32x128xf32> to vector<32x128xf32>
    %cst_22 = arith.constant 0.000000e+00 : f32
    %67 = vector.shape_cast %15 : vector<1x2048xf32> to vector<1x2048xf32>
    %68 = vector.broadcast %67 : vector<1x2048xf32> to vector<32x2048xf32>
    %69 = vector.broadcast %cst_22 : f32 to vector<32x2048xf32>
    %70 = arith.select %53, %68, %69 : vector<32x2048xi1>, vector<32x2048xf32>
    %cst_23 = arith.constant dense<0.000000e+00> : vector<32xf32>
    %71 = vector.multi_reduction <add>, %70, %cst_23 [1] : vector<32x2048xf32> to vector<32xf32>
    %72 = vector.shape_cast %71 : vector<32xf32> to vector<32x1xf32>
    %73 = vector.broadcast %72 : vector<32x1xf32> to vector<32x128xf32>
    %74 = arith.addf %66, %73 : vector<32x128xf32>
    %c0_24 = arith.constant 0 : index
    %c0_25 = arith.constant 0 : index
    %c0_26 = arith.constant 0 : index
    %75 = vector.load %arg5[%c0_24, %c0_25, %c0_26] : memref<1x32x128xf32, #tpu.memory_space<vmem>>, vector<1x32x128xf32>
    %76 = vector.shape_cast %75 : vector<1x32x128xf32> to vector<32x128xf32>
    %77 = vector.shape_cast %74 : vector<32x128xf32> to vector<1x32x128xf32>
    tpu.vector_store %arg5[%c0_24, %c0_25, %c0_26], %77 {strides = array<i32>} : memref<1x32x128xf32, #tpu.memory_space<vmem>>, vector<1x32x128xf32>,
    return
  }
  func.func @transform_0(%arg0: i32, %arg1: i32) -> (i32, i32) {
    %c1_i32 = arith.constant 1 : i32
    %0 = arith.muli %arg0, %c1_i32 : i32
    %1 = arith.addi %0, %arg1 : i32
    %c0_i32 = arith.constant 0 : i32
    %c0_i32_0 = arith.constant 0 : i32
    return %c0_i32, %1 : i32, i32
  }
  func.func @transform_1(%arg0: i32, %arg1: i32) -> (i32, i32) {
    %c1_i32 = arith.constant 1 : i32
    %0 = arith.muli %arg0, %c1_i32 : i32
    %1 = arith.addi %0, %arg1 : i32
    %c0_i32 = arith.constant 0 : i32
    %c0_i32_0 = arith.constant 0 : i32
    return %c0_i32, %1 : i32, i32
  }
  func.func @transform_2(%arg0: i32, %arg1: i32) -> (i32, i32, i32) {
    %c0_i32 = arith.constant 0 : i32
    %c0_i32_0 = arith.constant 0 : i32
    %c0_i32_1 = arith.constant 0 : i32
    return %arg0, %c0_i32, %c0_i32_0 : i32, i32, i32
  }
  func.func @transform_3(%arg0: i32, %arg1: i32) -> (i32, i32, i32) {
    %c0_i32 = arith.constant 0 : i32
    %c0_i32_0 = arith.constant 0 : i32
    %c0_i32_1 = arith.constant 0 : i32
    return %arg0, %c0_i32, %c0_i32_0 : i32, i32, i32
  }
}

</mosaic_0001>

<llo_original>
// kernel: tpu_custom_call.1
$region0: #{tpu_custom_call.1}
  #allocation0 [shape = 'u32[]', space=smem, size = 0x4, offset = 0x4, fixed_abs, tag = 'smem constant byte address 0x4 - core index']
  #allocation1 [shape = 'u32[144,128]{1,0:T(1,128)}', space=vmem, size = 0x12000, scoped, tag = 'internal scratch']
  %s0 = inlined_call_operand.hbm [shape: f32[16,2048], index: 0, kind: input, shape index: {}]
  %s1 = inlined_call_operand.hbm [shape: s32[1,2048], index: 1, kind: input, shape index: {}]
  %s2 = inlined_call_operand.hbm [shape: f32[1,32,128], index: 2, kind: output, shape index: {0}]
  %s3 = inlined_call_operand.hbm [shape: f32[1,32,128], index: 3, kind: output, shape index: {1}]
  %4 = xla_tuple %s2, %s3
  %s5 = sld [smem:[#allocation0]]
  $region38: #{tpu_custom_call.1} parent=0
    _
  %s7 = ssub.s32 1, %s5
  %s8 = scalar_select 0, %s7, %s5
  $region1: #{tpu_custom_call.1} parent=0
    #allocation2 [shape = 'u8[131072]{0}', space=vmem, size = 0x20000, scoped, tag = 'input window, operand 0, single buffered']
    #allocation3 [shape = 's32[1]{0}', space=sflag, size = 0x4, scoped, tag = 'scoped memory for tpu_custom_call.1']
    #allocation4 [shape = 's32[1]{0}', space=sflag, size = 0x4, scoped, tag = 'scoped memory for tpu_custom_call.1']
    #allocation5 [shape = 'u8[8192]{0}', space=vmem, size = 0x2000, scoped, tag = 'input window, operand 1, single buffered']
    #allocation6 [shape = 's32[1]{0}', space=sflag, size = 0x4, scoped, tag = 'scoped memory for tpu_custom_call.1']
    #allocation7 [shape = 'u8[16384]{0}', space=vmem, size = 0x4000, scoped, tag = 'output window, operand 0, single buffered']
    #allocation8 [shape = 'u8[16384]{0}', space=vmem, size = 0x4000, scoped, tag = 'output window, operand 1, single buffered']
    #allocation9 [shape = 's32[1]{0}', space=sflag, size = 0x4, scoped, tag = 'scoped memory for tpu_custom_call.1']
    %9 = vsyncpa [#allocation3], 0
    %10 = vsyncpa [#allocation6], 0
    %11 = vsyncpa [#allocation4], 0
    %12 = vsyncpa [#allocation9], 0
    // Predicated region
    $region2: #{tpu_custom_call.1} parent=1 // pred_check
      _
    $region3: #{tpu_custom_call.1} parent=1 // pred_check_branch
      %14 = sbr.rel (0) target = $region5
    $region4: #{tpu_custom_call.1} parent=1 // pred_region
      %s15 = sadd.s32 0, 0
      %s16 = smul.u32 16, %s15
      %s18 = ssub.s32 4096, 4096
      %19 = vsyncadd [#allocation3], %s18
      %s20 = smul.addr %s16, 128
      %s21 = scalar_lea.hbm %s0, %s20
      %s22 = sshll.u32 [#allocation2], 4
      %s23 = int_to_ptr.vmem [resolvable:$true] %s22
      %28 = dma.hbm_to_vmem [thread:$0]  %s21, 4096, %s23, [#allocation3], 2048, 2048, 128
    $region5: #{tpu_custom_call.1} parent=1 // pred_fallthru
      _
    // Predicated region
    $region6: #{tpu_custom_call.1} parent=1 // pred_check
      _
    $region7: #{tpu_custom_call.1} parent=1 // pred_check_branch
      %30 = sbr.rel (0) target = $region9
    $region8: #{tpu_custom_call.1} parent=1 // pred_region
      %s31 = sadd.s32 0, 0
      %s32 = smul.u32 16, %s31
      %s34 = ssub.s32 256, 256
      %35 = vsyncadd [#allocation6], %s34
      %s36 = smul.addr %s32, 16
      %s37 = scalar_lea.hbm %s1, %s36
      %s39 = sshll.u32 [#allocation5], 4
      %s40 = int_to_ptr.vmem [resolvable:$true] %s39
      %42 = dma.hbm_to_vmem [thread:$0]  %s37, 256, %s40, [#allocation6]
    $region9: #{tpu_custom_call.1} parent=1 // pred_fallthru
      _
    // Predicated region
    $region10: #{tpu_custom_call.1} parent=1 // pred_check
      _
    $region11: #{tpu_custom_call.1} parent=1 // pred_check_branch
      %44 = sbr.rel (0) target = $region13
    $region12: #{tpu_custom_call.1} parent=1 // pred_region
      %45 = dma.done [#allocation3], 4096
    $region13: #{tpu_custom_call.1} parent=1 // pred_fallthru
      _
    // Predicated region
    $region14: #{tpu_custom_call.1} parent=1 // pred_check
      _
    $region15: #{tpu_custom_call.1} parent=1 // pred_check_branch
      %47 = sbr.rel (0) target = $region17
    $region16: #{tpu_custom_call.1} parent=1 // pred_region
      %48 = dma.done [#allocation6], 256
    $region17: #{tpu_custom_call.1} parent=1 // pred_fallthru
      _
    %s49 = sadd.s32 0, 0
    %s50 = smul.u32 16, %s49
    %s51 = sadd.s32 0, 0
    %s52 = smul.u32 16, %s51
    %p53 = scmp.eq.s32.totalorder 0, 0
    // Predicated region
    $region18: #{tpu_custom_call.1} parent=1 // pred_check
      %p54 = pneg %p53
    $region19: #{tpu_custom_call.1} parent=1 // pred_check_branch
      %56 = sbr.rel (%p54) target = $region21
    $region20: #{tpu_custom_call.1} parent=1 // pred_region
      %57 = vst [vmem:[#allocation7] sm:$0xff] 0.0
      %58 = vst [vmem:[#allocation7 + $0x8] sm:$0xff] 0.0
      %59 = vst [vmem:[#allocation7 + $0x10] sm:$0xff] 0.0
      %60 = vst [vmem:[#allocation7 + $0x18] sm:$0xff] 0.0
      %61 = vst [vmem:[#allocation8] sm:$0xff] 0.0
      %62 = vst [vmem:[#allocation8 + $0x8] sm:$0xff] 0.0
      %63 = vst [vmem:[#allocation8 + $0x10] sm:$0xff] 0.0
      %64 = vst [vmem:[#allocation8 + $0x18] sm:$0xff] 0.0
    $region21: #{tpu_custom_call.1} parent=1 // pred_fallthru
      _
    %v65 = vld [vmem:[#allocation2] sm:$0xff]
    %v66 = vld [vmem:[#allocation2 + $0x8] sm:$0xff]
    %v67 = vld [vmem:[#allocation2 + $0x10] sm:$0xff]
    %v68 = vld [vmem:[#allocation2 + $0x18] sm:$0xff]
    %v69 = vld [vmem:[#allocation2 + $0x20] sm:$0xff]
    %v70 = vld [vmem:[#allocation2 + $0x28] sm:$0xff]
    %v71 = vld [vmem:[#allocation2 + $0x30] sm:$0xff]
    %v72 = vld [vmem:[#allocation2 + $0x38] sm:$0xff]
    %v73 = vld [vmem:[#allocation2 + $0x40] sm:$0xff]
    %v74 = vld [vmem:[#allocation2 + $0x48] sm:$0xff]
    %v75 = vld [vmem:[#allocation2 + $0x50] sm:$0xff]
    %v76 = vld [vmem:[#allocation2 + $0x58] sm:$0xff]
    %v77 = vld [vmem:[#allocation2 + $0x60] sm:$0xff]
    %v78 = vld [vmem:[#allocation2 + $0x68] sm:$0xff]
    %v79 = vld [vmem:[#allocation2 + $0x70] sm:$0xff]
    %v80 = vld [vmem:[#allocation2 + $0x78] sm:$0xff]
    %v81 = vld [vmem:[#allocation2 + $0x80] sm:$0xff]
    %v82 = vld [vmem:[#allocation2 + $0x88] sm:$0xff]
    %v83 = vld [vmem:[#allocation2 + $0x90] sm:$0xff]
    %v84 = vld [vmem:[#allocation2 + $0x98] sm:$0xff]
    %v85 = vld [vmem:[#allocation2 + $0xa0] sm:$0xff]
    %v86 = vld [vmem:[#allocation2 + $0xa8] sm:$0xff]
    %v87 = vld [vmem:[#allocation2 + $0xb0] sm:$0xff]
    %v88 = vld [vmem:[#allocation2 + $0xb8] sm:$0xff]
    %v89 = vld [vmem:[#allocation2 + $0xc0] sm:$0xff]
    %v90 = vld [vmem:[#allocation2 + $0xc8] sm:$0xff]
    %v91 = vld [vmem:[#allocation2 + $0xd0] sm:$0xff]
    %v92 = vld [vmem:[#allocation2 + $0xd8] sm:$0xff]
    %v93 = vld [vmem:[#allocation2 + $0xe0] sm:$0xff]
    %v94 = vld [vmem:[#allocation2 + $0xe8] sm:$0xff]
    %v95 = vld [vmem:[#allocation2 + $0xf0] sm:$0xff]
    %v96 = vld [vmem:[#allocation2 + $0xf8] sm:$0xff]
    %v97 = vmax.f32 %v65, %v81
    %v98 = vrot.slane %v97, 4
    %v99 = vmax.f32 %v97, %v98
    %v100 = vrot.slane %v99, 2
    %v101 = vmax.f32 %v99, %v100
    %v102 = vrot.slane %v101, 1
    %v103 = vmax.f32 %v101, %v102
    %v104 = vmax.f32 %v66, %v82
    %v105 = vrot.slane %v104, 4
    %v106 = vmax.f32 %v104, %v105
    %v107 = vrot.slane %v106, 2
    %v108 = vmax.f32 %v106, %v107
    %v109 = vrot.slane %v108, 1
    %v110 = vmax.f32 %v108, %v109
    %v111 = vmax.f32 %v67, %v83
    %v112 = vrot.slane %v111, 4
    %v113 = vmax.f32 %v111, %v112
    %v114 = vrot.slane %v113, 2
    %v115 = vmax.f32 %v113, %v114
    %v116 = vrot.slane %v115, 1
    %v117 = vmax.f32 %v115, %v116
    %v118 = vmax.f32 %v68, %v84
    %v119 = vrot.slane %v118, 4
    %v120 = vmax.f32 %v118, %v119
    %v121 = vrot.slane %v120, 2
    %v122 = vmax.f32 %v120, %v121
    %v123 = vrot.slane %v122, 1
    %v124 = vmax.f32 %v122, %v123
    %v125 = vmax.f32 %v69, %v85
    %v126 = vrot.slane %v125, 4
    %v127 = vmax.f32 %v125, %v126
    %v128 = vrot.slane %v127, 2
    %v129 = vmax.f32 %v127, %v128
    %v130 = vrot.slane %v129, 1
    %v131 = vmax.f32 %v129, %v130
    %v132 = vmax.f32 %v70, %v86
    %v133 = vrot.slane %v132, 4
    %v134 = vmax.f32 %v132, %v133
    %v135 = vrot.slane %v134, 2
    %v136 = vmax.f32 %v134, %v135
    %v137 = vrot.slane %v136, 1
    %v138 = vmax.f32 %v136, %v137
    %v139 = vmax.f32 %v71, %v87
    %v140 = vrot.slane %v139, 4
    %v141 = vmax.f32 %v139, %v140
    %v142 = vrot.slane %v141, 2
    %v143 = vmax.f32 %v141, %v142
    %v144 = vrot.slane %v143, 1
    %v145 = vmax.f32 %v143, %v144
    %v146 = vmax.f32 %v72, %v88
    %v147 = vrot.slane %v146, 4
    %v148 = vmax.f32 %v146, %v147
    %v149 = vrot.slane %v148, 2
    %v150 = vmax.f32 %v148, %v149
    %v151 = vrot.slane %v150, 1
    %v152 = vmax.f32 %v150, %v151
    %v153 = vmax.f32 %v73, %v89
    %v154 = vrot.slane %v153, 4
    %v155 = vmax.f32 %v153, %v154
    %v156 = vrot.slane %v155, 2
    %v157 = vmax.f32 %v155, %v156
    %v158 = vrot.slane %v157, 1
    %v159 = vmax.f32 %v157, %v158
    %v160 = vmax.f32 %v74, %v90
    %v161 = vrot.slane %v160, 4
    %v162 = vmax.f32 %v160, %v161
    %v163 = vrot.slane %v162, 2
    %v164 = vmax.f32 %v162, %v163
    %v165 = vrot.slane %v164, 1
    %v166 = vmax.f32 %v164, %v165
    %v167 = vmax.f32 %v75, %v91
    %v168 = vrot.slane %v167, 4
    %v169 = vmax.f32 %v167, %v168
    %v170 = vrot.slane %v169, 2
    %v171 = vmax.f32 %v169, %v170
    %v172 = vrot.slane %v171, 1
    %v173 = vmax.f32 %v171, %v172
    %v174 = vmax.f32 %v76, %v92
    %v175 = vrot.slane %v174, 4
    %v176 = vmax.f32 %v174, %v175
    %v177 = vrot.slane %v176, 2
    %v178 = vmax.f32 %v176, %v177
    %v179 = vrot.slane %v178, 1
    %v180 = vmax.f32 %v178, %v179
    %v181 = vmax.f32 %v77, %v93
    %v182 = vrot.slane %v181, 4
    %v183 = vmax.f32 %v181, %v182
    %v184 = vrot.slane %v183, 2
    %v185 = vmax.f32 %v183, %v184
    %v186 = vrot.slane %v185, 1
    %v187 = vmax.f32 %v185, %v186
    %v188 = vmax.f32 %v78, %v94
    %v189 = vrot.slane %v188, 4
    %v190 = vmax.f32 %v188, %v189
    %v191 = vrot.slane %v190, 2
    %v192 = vmax.f32 %v190, %v191
    %v193 = vrot.slane %v192, 1
    %v194 = vmax.f32 %v192, %v193
    %v195 = vmax.f32 %v79, %v95
    %v196 = vrot.slane %v195, 4
    %v197 = vmax.f32 %v195, %v196
    %v198 = vrot.slane %v197, 2
    %v199 = vmax.f32 %v197, %v198
    %v200 = vrot.slane %v199, 1
    %v201 = vmax.f32 %v199, %v200
    %v202 = vmax.f32 %v80, %v96
    %v203 = vrot.slane %v202, 4
    %v204 = vmax.f32 %v202, %v203
    %v205 = vrot.slane %v204, 2
    %v206 = vmax.f32 %v204, %v205
    %v207 = vrot.slane %v206, 1
    %v208 = vmax.f32 %v206, %v207
    %v209 = vsub.f32 %v65, %v103
    %v210 = vsub.f32 %v66, %v110
    %v211 = vsub.f32 %v67, %v117
    %v212 = vsub.f32 %v68, %v124
    %v213 = vsub.f32 %v69, %v131
    %v214 = vsub.f32 %v70, %v138
    %v215 = vsub.f32 %v71, %v145
    %v216 = vsub.f32 %v72, %v152
    %v217 = vsub.f32 %v73, %v159
    %v218 = vsub.f32 %v74, %v166
    %v219 = vsub.f32 %v75, %v173
    %v220 = vsub.f32 %v76, %v180
    %v221 = vsub.f32 %v77, %v187
    %v222 = vsub.f32 %v78, %v194
    %v223 = vsub.f32 %v79, %v201
    %v224 = vsub.f32 %v80, %v208
    %v225 = vsub.f32 %v81, %v103
    %v226 = vsub.f32 %v82, %v110
    %v227 = vsub.f32 %v83, %v117
    %v228 = vsub.f32 %v84, %v124
    %v229 = vsub.f32 %v85, %v131
    %v230 = vsub.f32 %v86, %v138
    %v231 = vsub.f32 %v87, %v145
    %v232 = vsub.f32 %v88, %v152
    %v233 = vsub.f32 %v89, %v159
    %v234 = vsub.f32 %v90, %v166
    %v235 = vsub.f32 %v91, %v173
    %v236 = vsub.f32 %v92, %v180
    %v237 = vsub.f32 %v93, %v187
    %v238 = vsub.f32 %v94, %v194
    %v239 = vsub.f32 %v95, %v201
    %v240 = vsub.f32 %v96, %v208
    %v241 = vmul.f32 %v209, 1.442695
    %v242 = vpow.pop %v241
    %v243 = vmul.f32 %v210, 1.442695
    %v244 = vpow.pop %v243
    %v245 = vmul.f32 %v211, 1.442695
    %v246 = vpow.pop %v245
    %v247 = vmul.f32 %v212, 1.442695
    %v248 = vpow.pop %v247
    %v249 = vmul.f32 %v213, 1.442695
    %v250 = vpow.pop %v249
    %v251 = vmul.f32 %v214, 1.442695
    %v252 = vpow.pop %v251
    %v253 = vmul.f32 %v215, 1.442695
    %v254 = vpow.pop %v253
    %v255 = vmul.f32 %v216, 1.442695
    %v256 = vpow.pop %v255
    %v257 = vmul.f32 %v217, 1.442695
    %v258 = vpow.pop %v257
    %v259 = vmul.f32 %v218, 1.442695
    %v260 = vpow.pop %v259
    %v261 = vmul.f32 %v219, 1.442695
    %v262 = vpow.pop %v261
    %v263 = vmul.f32 %v220, 1.442695
    %v264 = vpow.pop %v263
    %v265 = vmul.f32 %v221, 1.442695
    %v266 = vpow.pop %v265
    %v267 = vmul.f32 %v222, 1.442695
    %v268 = vpow.pop %v267
    %v269 = vmul.f32 %v223, 1.442695
    %v270 = vpow.pop %v269
    %v271 = vmul.f32 %v224, 1.442695
    %v272 = vpow.pop %v271
    %v273 = vmul.f32 %v225, 1.442695
    %v274 = vpow.pop %v273
    %v275 = vmul.f32 %v226, 1.442695
    %v276 = vpow.pop %v275
    %v277 = vmul.f32 %v227, 1.442695
    %v278 = vpow.pop %v277
    %v279 = vmul.f32 %v228, 1.442695
    %v280 = vpow.pop %v279
    %v281 = vmul.f32 %v229, 1.442695
    %v282 = vpow.pop %v281
    %v283 = vmul.f32 %v230, 1.442695
    %v284 = vpow.pop %v283
    %v285 = vmul.f32 %v231, 1.442695
    %v286 = vpow.pop %v285
    %v287 = vmul.f32 %v232, 1.442695
    %v288 = vpow.pop %v287
    %v289 = vmul.f32 %v233, 1.442695
    %v290 = vpow.pop %v289
    %v291 = vmul.f32 %v234, 1.442695
    %v292 = vpow.pop %v291
    %v293 = vmul.f32 %v235, 1.442695
    %v294 = vpow.pop %v293
    %v295 = vmul.f32 %v236, 1.442695
    %v296 = vpow.pop %v295
    %v297 = vmul.f32 %v237, 1.442695
    %v298 = vpow.pop %v297
    %v299 = vmul.f32 %v238, 1.442695
    %v300 = vpow.pop %v299
    %v301 = vmul.f32 %v239, 1.442695
    %v302 = vpow.pop %v301
    %v303 = vmul.f32 %v240, 1.442695
    %v304 = vpow.pop %v303
    %v305 = vadd.f32 %v242, %v274
    %v306 = vrot.slane %v305, 4
    %v307 = vadd.f32 %v305, %v306
    %v308 = vrot.slane %v307, 2
    %v309 = vadd.f32 %v307, %v308
    %v310 = vrot.slane %v309, 1
    %v311 = vadd.f32 %v309, %v310
    %v312 = vadd.f32 %v244, %v276
    %v313 = vrot.slane %v312, 4
    %v314 = vadd.f32 %v312, %v313
    %v315 = vrot.slane %v314, 2
    %v316 = vadd.f32 %v314, %v315
    %v317 = vrot.slane %v316, 1
    %v318 = vadd.f32 %v316, %v317
    %v319 = vadd.f32 %v246, %v278
    %v320 = vrot.slane %v319, 4
    %v321 = vadd.f32 %v319, %v320
    %v322 = vrot.slane %v321, 2
    %v323 = vadd.f32 %v321, %v322
    %v324 = vrot.slane %v323, 1
    %v325 = vadd.f32 %v323, %v324
    %v326 = vadd.f32 %v248, %v280
    %v327 = vrot.slane %v326, 4
    %v328 = vadd.f32 %v326, %v327
    %v329 = vrot.slane %v328, 2
    %v330 = vadd.f32 %v328, %v329
    %v331 = vrot.slane %v330, 1
    %v332 = vadd.f32 %v330, %v331
    %v333 = vadd.f32 %v250, %v282
    %v334 = vrot.slane %v333, 4
    %v335 = vadd.f32 %v333, %v334
    %v336 = vrot.slane %v335, 2
    %v337 = vadd.f32 %v335, %v336
    %v338 = vrot.slane %v337, 1
    %v339 = vadd.f32 %v337, %v338
    %v340 = vadd.f32 %v252, %v284
    %v341 = vrot.slane %v340, 4
    %v342 = vadd.f32 %v340, %v341
    %v343 = vrot.slane %v342, 2
    %v344 = vadd.f32 %v342, %v343
    %v345 = vrot.slane %v344, 1
    %v346 = vadd.f32 %v344, %v345
    %v347 = vadd.f32 %v254, %v286
    %v348 = vrot.slane %v347, 4
    %v349 = vadd.f32 %v347, %v348
    %v350 = vrot.slane %v349, 2
    %v351 = vadd.f32 %v349, %v350
    %v352 = vrot.slane %v351, 1
    %v353 = vadd.f32 %v351, %v352
    %v354 = vadd.f32 %v256, %v288
    %v355 = vrot.slane %v354, 4
    %v356 = vadd.f32 %v354, %v355
    %v357 = vrot.slane %v356, 2
    %v358 = vadd.f32 %v356, %v357
    %v359 = vrot.slane %v358, 1
    %v360 = vadd.f32 %v358, %v359
    %v361 = vadd.f32 %v258, %v290
    %v362 = vrot.slane %v361, 4
    %v363 = vadd.f32 %v361, %v362
    %v364 = vrot.slane %v363, 2
    %v365 = vadd.f32 %v363, %v364
    %v366 = vrot.slane %v365, 1
    %v367 = vadd.f32 %v365, %v366
    %v368 = vadd.f32 %v260, %v292
    %v369 = vrot.slane %v368, 4
    %v370 = vadd.f32 %v368, %v369
    %v371 = vrot.slane %v370, 2
    %v372 = vadd.f32 %v370, %v371
    %v373 = vrot.slane %v372, 1
    %v374 = vadd.f32 %v372, %v373
    %v375 = vadd.f32 %v262, %v294
    %v376 = vrot.slane %v375, 4
    %v377 = vadd.f32 %v375, %v376
    %v378 = vrot.slane %v377, 2
    %v379 = vadd.f32 %v377, %v378
    %v380 = vrot.slane %v379, 1
    %v381 = vadd.f32 %v379, %v380
    %v382 = vadd.f32 %v264, %v296
    %v383 = vrot.slane %v382, 4
    %v384 = vadd.f32 %v382, %v383
    %v385 = vrot.slane %v384, 2
    %v386 = vadd.f32 %v384, %v385
    %v387 = vrot.slane %v386, 1
    %v388 = vadd.f32 %v386, %v387
    %v389 = vadd.f32 %v266, %v298
    %v390 = vrot.slane %v389, 4
    %v391 = vadd.f32 %v389, %v390
    %v392 = vrot.slane %v391, 2
    %v393 = vadd.f32 %v391, %v392
    %v394 = vrot.slane %v393, 1
    %v395 = vadd.f32 %v393, %v394
    %v396 = vadd.f32 %v268, %v300
    %v397 = vrot.slane %v396, 4
    %v398 = vadd.f32 %v396, %v397
    %v399 = vrot.slane %v398, 2
    %v400 = vadd.f32 %v398, %v399
    %v401 = vrot.slane %v400, 1
    %v402 = vadd.f32 %v400, %v401
    %v403 = vadd.f32 %v270, %v302
    %v404 = vrot.slane %v403, 4
    %v405 = vadd.f32 %v403, %v404
    %v406 = vrot.slane %v405, 2
    %v407 = vadd.f32 %v405, %v406
    %v408 = vrot.slane %v407, 1
    %v409 = vadd.f32 %v407, %v408
    %v410 = vadd.f32 %v272, %v304
    %v411 = vrot.slane %v410, 4
    %v412 = vadd.f32 %v410, %v411
    %v413 = vrot.slane %v412, 2
    %v414 = vadd.f32 %v412, %v413
    %v415 = vrot.slane %v414, 1
    %v416 = vadd.f32 %v414, %v415
    %v417 = vrcp.pop %v311
    %v418 = vrcp.pop %v318
    %v419 = vrcp.pop %v325
    %v420 = vrcp.pop %v332
    %v421 = vrcp.pop %v339
    %v422 = vrcp.pop %v346
    %v423 = vrcp.pop %v353
    %v424 = vrcp.pop %v360
    %v425 = vrcp.pop %v367
    %v426 = vrcp.pop %v374
    %v427 = vrcp.pop %v381
    %v428 = vrcp.pop %v388
    %v429 = vrcp.pop %v395
    %v430 = vrcp.pop %v402
    %v431 = vrcp.pop %v409
    %v432 = vrcp.pop %v416
    %v433 = vmul.f32 %v311, %v417
    %v434 = vmul.f32 %v318, %v418
    %v435 = vmul.f32 %v325, %v419
    %v436 = vmul.f32 %v332, %v420
    %v437 = vmul.f32 %v339, %v421
    %v438 = vmul.f32 %v346, %v422
    %v439 = vmul.f32 %v353, %v423
    %v440 = vmul.f32 %v360, %v424
    %v441 = vmul.f32 %v367, %v425
    %v442 = vmul.f32 %v374, %v426
    %v443 = vmul.f32 %v381, %v427
    %v444 = vmul.f32 %v388, %v428
    %v445 = vmul.f32 %v395, %v429
    %v446 = vmul.f32 %v402, %v430
    %v447 = vmul.f32 %v409, %v431
    %v448 = vmul.f32 %v416, %v432
    %v449 = vsub.f32 2.0, %v433
    %v450 = vsub.f32 2.0, %v434
    %v451 = vsub.f32 2.0, %v435
    %v452 = vsub.f32 2.0, %v436
    %v453 = vsub.f32 2.0, %v437
    %v454 = vsub.f32 2.0, %v438
    %v455 = vsub.f32 2.0, %v439
    %v456 = vsub.f32 2.0, %v440
    %v457 = vsub.f32 2.0, %v441
    %v458 = vsub.f32 2.0, %v442
    %v459 = vsub.f32 2.0, %v443
    %v460 = vsub.f32 2.0, %v444
    %v461 = vsub.f32 2.0, %v445
    %v462 = vsub.f32 2.0, %v446
    %v463 = vsub.f32 2.0, %v447
    %v464 = vsub.f32 2.0, %v448
    %v465 = vmul.f32 %v417, %v449
    %v466 = vmul.f32 %v418, %v450
    %v467 = vmul.f32 %v419, %v451
    %v468 = vmul.f32 %v420, %v452
    %v469 = vmul.f32 %v421, %v453
    %v470 = vmul.f32 %v422, %v454
    %v471 = vmul.f32 %v423, %v455
    %v472 = vmul.f32 %v424, %v456
    %v473 = vmul.f32 %v425, %v457
    %v474 = vmul.f32 %v426, %v458
    %v475 = vmul.f32 %v427, %v459
    %v476 = vmul.f32 %v428, %v460
    %v477 = vmul.f32 %v429, %v461
    %v478 = vmul.f32 %v430, %v462
    %v479 = vmul.f32 %v431, %v463
    %v480 = vmul.f32 %v432, %v464
    %v481 = vlaneseq
    %v482 = vshrl.u32 %v481, 7
    %v483 = vadd.s32 %v482, 8
    %v484 = vcvt.s32.f32 %v482
    %v485 = vcvt.s32.f32 %v483
    %vm486 = vcmp.eq.f32.partialorder %v65, %v103
    %vm487 = vcmp.eq.f32.partialorder %v66, %v110
    %vm488 = vcmp.eq.f32.partialorder %v67, %v117
    %vm489 = vcmp.eq.f32.partialorder %v68, %v124
    %vm490 = vcmp.eq.f32.partialorder %v69, %v131
    %vm491 = vcmp.eq.f32.partialorder %v70, %v138
    %vm492 = vcmp.eq.f32.partialorder %v71, %v145
    %vm493 = vcmp.eq.f32.partialorder %v72, %v152
    %vm494 = vcmp.eq.f32.partialorder %v73, %v159
    %vm495 = vcmp.eq.f32.partialorder %v74, %v166
    %vm496 = vcmp.eq.f32.partialorder %v75, %v173
    %vm497 = vcmp.eq.f32.partialorder %v76, %v180
    %vm498 = vcmp.eq.f32.partialorder %v77, %v187
    %vm499 = vcmp.eq.f32.partialorder %v78, %v194
    %vm500 = vcmp.eq.f32.partialorder %v79, %v201
    %vm501 = vcmp.eq.f32.partialorder %v80, %v208
    %vm502 = vcmp.eq.f32.partialorder %v81, %v103
    %vm503 = vcmp.eq.f32.partialorder %v82, %v110
    %vm504 = vcmp.eq.f32.partialorder %v83, %v117
    %vm505 = vcmp.eq.f32.partialorder %v84, %v124
    %vm506 = vcmp.eq.f32.partialorder %v85, %v131
    %vm507 = vcmp.eq.f32.partialorder %v86, %v138
    %vm508 = vcmp.eq.f32.partialorder %v87, %v145
    %vm509 = vcmp.eq.f32.partialorder %v88, %v152
    %vm510 = vcmp.eq.f32.partialorder %v89, %v159
    %vm511 = vcmp.eq.f32.partialorder %v90, %v166
    %vm512 = vcmp.eq.f32.partialorder %v91, %v173
    %vm513 = vcmp.eq.f32.partialorder %v92, %v180
    %vm514 = vcmp.eq.f32.partialorder %v93, %v187
    %vm515 = vcmp.eq.f32.partialorder %v94, %v194
    %vm516 = vcmp.eq.f32.partialorder %v95, %v201
    %vm517 = vcmp.eq.f32.partialorder %v96, %v208
    %v518 = vsel %vm486, %v484, 16.0
    %v519 = vsel %vm487, %v484, 16.0
    %v520 = vsel %vm488, %v484, 16.0
    %v521 = vsel %vm489, %v484, 16.0
    %v522 = vsel %vm490, %v484, 16.0
    %v523 = vsel %vm491, %v484, 16.0
    %v524 = vsel %vm492, %v484, 16.0
    %v525 = vsel %vm493, %v484, 16.0
    %v526 = vsel %vm494, %v484, 16.0
    %v527 = vsel %vm495, %v484, 16.0
    %v528 = vsel %vm496, %v484, 16.0
    %v529 = vsel %vm497, %v484, 16.0
    %v530 = vsel %vm498, %v484, 16.0
    %v531 = vsel %vm499, %v484, 16.0
    %v532 = vsel %vm500, %v484, 16.0
    %v533 = vsel %vm501, %v484, 16.0
    %v534 = vsel %vm502, %v485, 16.0
    %v535 = vsel %vm503, %v485, 16.0
    %v536 = vsel %vm504, %v485, 16.0
    %v537 = vsel %vm505, %v485, 16.0
    %v538 = vsel %vm506, %v485, 16.0
    %v539 = vsel %vm507, %v485, 16.0
    %v540 = vsel %vm508, %v485, 16.0
    %v541 = vsel %vm509, %v485, 16.0
    %v542 = vsel %vm510, %v485, 16.0
    %v543 = vsel %vm511, %v485, 16.0
    %v544 = vsel %vm512, %v485, 16.0
    %v545 = vsel %vm513, %v485, 16.0
    %v546 = vsel %vm514, %v485, 16.0
    %v547 = vsel %vm515, %v485, 16.0
    %v548 = vsel %vm516, %v485, 16.0
    %v549 = vsel %vm517, %v485, 16.0
    %v550 = vmin.f32 %v518, %v534
    %v551 = vrot.slane %v550, 4
    %v552 = vmin.f32 %v550, %v551
    %v553 = vrot.slane %v552, 2
    %v554 = vmin.f32 %v552, %v553
    %v555 = vrot.slane %v554, 1
    %v556 = vmin.f32 %v554, %v555
    %v557 = vmin.f32 %v519, %v535
    %v558 = vrot.slane %v557, 4
    %v559 = vmin.f32 %v557, %v558
    %v560 = vrot.slane %v559, 2
    %v561 = vmin.f32 %v559, %v560
    %v562 = vrot.slane %v561, 1
    %v563 = vmin.f32 %v561, %v562
    %v564 = vmin.f32 %v520, %v536
    %v565 = vrot.slane %v564, 4
    %v566 = vmin.f32 %v564, %v565
    %v567 = vrot.slane %v566, 2
    %v568 = vmin.f32 %v566, %v567
    %v569 = vrot.slane %v568, 1
    %v570 = vmin.f32 %v568, %v569
    %v571 = vmin.f32 %v521, %v537
    %v572 = vrot.slane %v571, 4
    %v573 = vmin.f32 %v571, %v572
    %v574 = vrot.slane %v573, 2
    %v575 = vmin.f32 %v573, %v574
    %v576 = vrot.slane %v575, 1
    %v577 = vmin.f32 %v575, %v576
    %v578 = vmin.f32 %v522, %v538
    %v579 = vrot.slane %v578, 4
    %v580 = vmin.f32 %v578, %v579
    %v581 = vrot.slane %v580, 2
    %v582 = vmin.f32 %v580, %v581
    %v583 = vrot.slane %v582, 1
    %v584 = vmin.f32 %v582, %v583
    %v585 = vmin.f32 %v523, %v539
    %v586 = vrot.slane %v585, 4
    %v587 = vmin.f32 %v585, %v586
    %v588 = vrot.slane %v587, 2
    %v589 = vmin.f32 %v587, %v588
    %v590 = vrot.slane %v589, 1
    %v591 = vmin.f32 %v589, %v590
    %v592 = vmin.f32 %v524, %v540
    %v593 = vrot.slane %v592, 4
    %v594 = vmin.f32 %v592, %v593
    %v595 = vrot.slane %v594, 2
    %v596 = vmin.f32 %v594, %v595
    %v597 = vrot.slane %v596, 1
    %v598 = vmin.f32 %v596, %v597
    %v599 = vmin.f32 %v525, %v541
    %v600 = vrot.slane %v599, 4
    %v601 = vmin.f32 %v599, %v600
    %v602 = vrot.slane %v601, 2
    %v603 = vmin.f32 %v601, %v602
    %v604 = vrot.slane %v603, 1
    %v605 = vmin.f32 %v603, %v604
    %v606 = vmin.f32 %v526, %v542
    %v607 = vrot.slane %v606, 4
    %v608 = vmin.f32 %v606, %v607
    %v609 = vrot.slane %v608, 2
    %v610 = vmin.f32 %v608, %v609
    %v611 = vrot.slane %v610, 1
    %v612 = vmin.f32 %v610, %v611
    %v613 = vmin.f32 %v527, %v543
    %v614 = vrot.slane %v613, 4
    %v615 = vmin.f32 %v613, %v614
    %v616 = vrot.slane %v615, 2
    %v617 = vmin.f32 %v615, %v616
    %v618 = vrot.slane %v617, 1
    %v619 = vmin.f32 %v617, %v618
    %v620 = vmin.f32 %v528, %v544
    %v621 = vrot.slane %v620, 4
    %v622 = vmin.f32 %v620, %v621
    %v623 = vrot.slane %v622, 2
    %v624 = vmin.f32 %v622, %v623
    %v625 = vrot.slane %v624, 1
    %v626 = vmin.f32 %v624, %v625
    %v627 = vmin.f32 %v529, %v545
    %v628 = vrot.slane %v627, 4
    %v629 = vmin.f32 %v627, %v628
    %v630 = vrot.slane %v629, 2
    %v631 = vmin.f32 %v629, %v630
    %v632 = vrot.slane %v631, 1
    %v633 = vmin.f32 %v631, %v632
    %v634 = vmin.f32 %v530, %v546
    %v635 = vrot.slane %v634, 4
    %v636 = vmin.f32 %v634, %v635
    %v637 = vrot.slane %v636, 2
    %v638 = vmin.f32 %v636, %v637
    %v639 = vrot.slane %v638, 1
    %v640 = vmin.f32 %v638, %v639
    %v641 = vmin.f32 %v531, %v547
    %v642 = vrot.slane %v641, 4
    %v643 = vmin.f32 %v641, %v642
    %v644 = vrot.slane %v643, 2
    %v645 = vmin.f32 %v643, %v644
    %v646 = vrot.slane %v645, 1
    %v647 = vmin.f32 %v645, %v646
    %v648 = vmin.f32 %v532, %v548
    %v649 = vrot.slane %v648, 4
    %v650 = vmin.f32 %v648, %v649
    %v651 = vrot.slane %v650, 2
    %v652 = vmin.f32 %v650, %v651
    %v653 = vrot.slane %v652, 1
    %v654 = vmin.f32 %v652, %v653
    %v655 = vmin.f32 %v533, %v549
    %v656 = vrot.slane %v655, 4
    %v657 = vmin.f32 %v655, %v656
    %v658 = vrot.slane %v657, 2
    %v659 = vmin.f32 %v657, %v658
    %v660 = vrot.slane %v659, 1
    %v661 = vmin.f32 %v659, %v660
    %v662 = vld [vmem:[#allocation5] sm:$0xff]
    %v663 = vld [vmem:[#allocation5 + $0x8] sm:$0xff]
    %v664 = vcvt.s32.f32 %v662
    %v665 = vcvt.s32.f32 %v663
    %v668 = vlaneseq
    %v669 = vshrl.u32 %v668, 7
    %v670 = vsub.s32 0, %v669
    %v671 = vrot.slane %v664, %v670
    %v672 = vlaneseq
    %v673 = vshrl.u32 %v672, 7
    %v674 = vsub.s32 1, %v673
    %v675 = vrot.slane %v664, %v674
    %v676 = vlaneseq
    %v677 = vshrl.u32 %v676, 7
    %v678 = vsub.s32 2, %v677
    %v679 = vrot.slane %v664, %v678
    %v680 = vlaneseq
    %v681 = vshrl.u32 %v680, 7
    %v682 = vsub.s32 3, %v681
    %v683 = vrot.slane %v664, %v682
    %v684 = vlaneseq
    %v685 = vshrl.u32 %v684, 7
    %v686 = vsub.s32 4, %v685
    %v687 = vrot.slane %v664, %v686
    %v688 = vlaneseq
    %v689 = vshrl.u32 %v688, 7
    %v690 = vsub.s32 5, %v689
    %v691 = vrot.slane %v664, %v690
    %v692 = vlaneseq
    %v693 = vshrl.u32 %v692, 7
    %v694 = vsub.s32 6, %v693
    %v695 = vrot.slane %v664, %v694
    %v696 = vlaneseq
    %v697 = vshrl.u32 %v696, 7
    %v698 = vsub.s32 7, %v697
    %v699 = vrot.slane %v664, %v698
    %v700 = vlaneseq
    %v701 = vshrl.u32 %v700, 7
    %v702 = vsub.s32 0, %v701
    %v703 = vrot.slane %v665, %v702
    %v704 = vlaneseq
    %v705 = vshrl.u32 %v704, 7
    %v706 = vsub.s32 1, %v705
    %v707 = vrot.slane %v665, %v706
    %v708 = vlaneseq
    %v709 = vshrl.u32 %v708, 7
    %v710 = vsub.s32 2, %v709
    %v711 = vrot.slane %v665, %v710
    %v712 = vlaneseq
    %v713 = vshrl.u32 %v712, 7
    %v714 = vsub.s32 3, %v713
    %v715 = vrot.slane %v665, %v714
    %v716 = vlaneseq
    %v717 = vshrl.u32 %v716, 7
    %v718 = vsub.s32 4, %v717
    %v719 = vrot.slane %v665, %v718
    %v720 = vlaneseq
    %v721 = vshrl.u32 %v720, 7
    %v722 = vsub.s32 5, %v721
    %v723 = vrot.slane %v665, %v722
    %v724 = vlaneseq
    %v725 = vshrl.u32 %v724, 7
    %v726 = vsub.s32 6, %v725
    %v727 = vrot.slane %v665, %v726
    %v728 = vlaneseq
    %v729 = vshrl.u32 %v728, 7
    %v730 = vsub.s32 7, %v729
    %v731 = vrot.slane %v665, %v730
    %vm748 = vcmp.eq.f32.partialorder %v556, %v671
    %vm749 = vcmp.eq.f32.partialorder %v563, %v675
    %vm750 = vcmp.eq.f32.partialorder %v570, %v679
    %vm751 = vcmp.eq.f32.partialorder %v577, %v683
    %vm752 = vcmp.eq.f32.partialorder %v584, %v687
    %vm753 = vcmp.eq.f32.partialorder %v591, %v691
    %vm754 = vcmp.eq.f32.partialorder %v598, %v695
    %vm755 = vcmp.eq.f32.partialorder %v605, %v699
    %vm756 = vcmp.eq.f32.partialorder %v612, %v703
    %vm757 = vcmp.eq.f32.partialorder %v619, %v707
    %vm758 = vcmp.eq.f32.partialorder %v626, %v711
    %vm759 = vcmp.eq.f32.partialorder %v633, %v715
    %vm760 = vcmp.eq.f32.partialorder %v640, %v719
    %vm761 = vcmp.eq.f32.partialorder %v647, %v723
    %vm762 = vcmp.eq.f32.partialorder %v654, %v727
    %vm763 = vcmp.eq.f32.partialorder %v661, %v731
    %v764 = vmul.f32 %v465, 15.0
    %v765 = vmul.f32 %v466, 15.0
    %v766 = vmul.f32 %v467, 15.0
    %v767 = vmul.f32 %v468, 15.0
    %v768 = vmul.f32 %v469, 15.0
    %v769 = vmul.f32 %v470, 15.0
    %v770 = vmul.f32 %v471, 15.0
    %v771 = vmul.f32 %v472, 15.0
    %v772 = vmul.f32 %v473, 15.0
    %v773 = vmul.f32 %v474, 15.0
    %v774 = vmul.f32 %v475, 15.0
    %v775 = vmul.f32 %v476, 15.0
    %v776 = vmul.f32 %v477, 15.0
    %v777 = vmul.f32 %v478, 15.0
    %v778 = vmul.f32 %v479, 15.0
    %v779 = vmul.f32 %v480, 15.0
    %v780 = vceil.f32 %v764
    %v781 = vceil.f32 %v765
    %v782 = vceil.f32 %v766
    %v783 = vceil.f32 %v767
    %v784 = vceil.f32 %v768
    %v785 = vceil.f32 %v769
    %v786 = vceil.f32 %v770
    %v787 = vceil.f32 %v771
    %v788 = vceil.f32 %v772
    %v789 = vceil.f32 %v773
    %v790 = vceil.f32 %v774
    %v791 = vceil.f32 %v775
    %v792 = vceil.f32 %v776
    %v793 = vceil.f32 %v777
    %v794 = vceil.f32 %v778
    %v795 = vceil.f32 %v779
    %v796 = vcvt.f32.s32.to.zero.pseudo %v780
    %v797 = vcvt.f32.s32.to.zero.pseudo %v781
    %v798 = vcvt.f32.s32.to.zero.pseudo %v782
    %v799 = vcvt.f32.s32.to.zero.pseudo %v783
    %v800 = vcvt.f32.s32.to.zero.pseudo %v784
    %v801 = vcvt.f32.s32.to.zero.pseudo %v785
    %v802 = vcvt.f32.s32.to.zero.pseudo %v786
    %v803 = vcvt.f32.s32.to.zero.pseudo %v787
    %v804 = vcvt.f32.s32.to.zero.pseudo %v788
    %v805 = vcvt.f32.s32.to.zero.pseudo %v789
    %v806 = vcvt.f32.s32.to.zero.pseudo %v790
    %v807 = vcvt.f32.s32.to.zero.pseudo %v791
    %v808 = vcvt.f32.s32.to.zero.pseudo %v792
    %v809 = vcvt.f32.s32.to.zero.pseudo %v793
    %v810 = vcvt.f32.s32.to.zero.pseudo %v794
    %v811 = vcvt.f32.s32.to.zero.pseudo %v795
    %v812 = vsub.s32 %v796, 1
    %v813 = vsub.s32 %v797, 1
    %v814 = vsub.s32 %v798, 1
    %v815 = vsub.s32 %v799, 1
    %v816 = vsub.s32 %v800, 1
    %v817 = vsub.s32 %v801, 1
    %v818 = vsub.s32 %v802, 1
    %v819 = vsub.s32 %v803, 1
    %v820 = vsub.s32 %v804, 1
    %v821 = vsub.s32 %v805, 1
    %v822 = vsub.s32 %v806, 1
    %v823 = vsub.s32 %v807, 1
    %v824 = vsub.s32 %v808, 1
    %v825 = vsub.s32 %v809, 1
    %v826 = vsub.s32 %v810, 1
    %v827 = vsub.s32 %v811, 1
    %vm828 = vcmp.gt.s32.totalorder %v812, 0
    %v829 = vsel %vm828, %v812, 0
    %vm830 = vcmp.gt.s32.totalorder %v813, 0
    %v831 = vsel %vm830, %v813, 0
    %vm832 = vcmp.gt.s32.totalorder %v814, 0
    %v833 = vsel %vm832, %v814, 0
    %vm834 = vcmp.gt.s32.totalorder %v815, 0
    %v835 = vsel %vm834, %v815, 0
    %vm836 = vcmp.gt.s32.totalorder %v816, 0
    %v837 = vsel %vm836, %v816, 0
    %vm838 = vcmp.gt.s32.totalorder %v817, 0
    %v839 = vsel %vm838, %v817, 0
    %vm840 = vcmp.gt.s32.totalorder %v818, 0
    %v841 = vsel %vm840, %v818, 0
    %vm842 = vcmp.gt.s32.totalorder %v819, 0
    %v843 = vsel %vm842, %v819, 0
    %vm844 = vcmp.gt.s32.totalorder %v820, 0
    %v845 = vsel %vm844, %v820, 0
    %vm846 = vcmp.gt.s32.totalorder %v821, 0
    %v847 = vsel %vm846, %v821, 0
    %vm848 = vcmp.gt.s32.totalorder %v822, 0
    %v849 = vsel %vm848, %v822, 0
    %vm850 = vcmp.gt.s32.totalorder %v823, 0
    %v851 = vsel %vm850, %v823, 0
    %vm852 = vcmp.gt.s32.totalorder %v824, 0
    %v853 = vsel %vm852, %v824, 0
    %vm854 = vcmp.gt.s32.totalorder %v825, 0
    %v855 = vsel %vm854, %v825, 0
    %vm856 = vcmp.gt.s32.totalorder %v826, 0
    %v857 = vsel %vm856, %v826, 0
    %vm858 = vcmp.gt.s32.totalorder %v827, 0
    %v859 = vsel %vm858, %v827, 0
    %vm860 = vcmp.lt.s32.totalorder %v829, 14
    %v861 = vsel %vm860, %v829, 14
    %vm862 = vcmp.lt.s32.totalorder %v831, 14
    %v863 = vsel %vm862, %v831, 14
    %vm864 = vcmp.lt.s32.totalorder %v833, 14
    %v865 = vsel %vm864, %v833, 14
    %vm866 = vcmp.lt.s32.totalorder %v835, 14
    %v867 = vsel %vm866, %v835, 14
    %vm868 = vcmp.lt.s32.totalorder %v837, 14
    %v869 = vsel %vm868, %v837, 14
    %vm870 = vcmp.lt.s32.totalorder %v839, 14
    %v871 = vsel %vm870, %v839, 14
    %vm872 = vcmp.lt.s32.totalorder %v841, 14
    %v873 = vsel %vm872, %v841, 14
    %vm874 = vcmp.lt.s32.totalorder %v843, 14
    %v875 = vsel %vm874, %v843, 14
    %vm876 = vcmp.lt.s32.totalorder %v845, 14
    %v877 = vsel %vm876, %v845, 14
    %vm878 = vcmp.lt.s32.totalorder %v847, 14
    %v879 = vsel %vm878, %v847, 14
    %vm880 = vcmp.lt.s32.totalorder %v849, 14
    %v881 = vsel %vm880, %v849, 14
    %vm882 = vcmp.lt.s32.totalorder %v851, 14
    %v883 = vsel %vm882, %v851, 14
    %vm884 = vcmp.lt.s32.totalorder %v853, 14
    %v885 = vsel %vm884, %v853, 14
    %vm886 = vcmp.lt.s32.totalorder %v855, 14
    %v887 = vsel %vm886, %v855, 14
    %vm888 = vcmp.lt.s32.totalorder %v857, 14
    %v889 = vsel %vm888, %v857, 14
    %vm890 = vcmp.lt.s32.totalorder %v859, 14
    %v891 = vsel %vm890, %v859, 14
    %v892 = vsel %vm748, 1, 0
    %v893 = vsel %vm749, 1, 0
    %v894 = vsel %vm750, 1, 0
    %v895 = vsel %vm751, 1, 0
    %v896 = vsel %vm752, 1, 0
    %v897 = vsel %vm753, 1, 0
    %v898 = vsel %vm754, 1, 0
    %v899 = vsel %vm755, 1, 0
    %v900 = vsel %vm756, 1, 0
    %v901 = vsel %vm757, 1, 0
    %v902 = vsel %vm758, 1, 0
    %v903 = vsel %vm759, 1, 0
    %v904 = vsel %vm760, 1, 0
    %v905 = vsel %vm761, 1, 0
    %v906 = vsel %vm762, 1, 0
    %v907 = vsel %vm763, 1, 0
    %v908 = vmul.u32 %v892, 15
    %v909 = vmul.u32 %v893, 15
    %v910 = vmul.u32 %v894, 15
    %v911 = vmul.u32 %v895, 15
    %v912 = vmul.u32 %v896, 15
    %v913 = vmul.u32 %v897, 15
    %v914 = vmul.u32 %v898, 15
    %v915 = vmul.u32 %v899, 15
    %v916 = vmul.u32 %v900, 15
    %v917 = vmul.u32 %v901, 15
    %v918 = vmul.u32 %v902, 15
    %v919 = vmul.u32 %v903, 15
    %v920 = vmul.u32 %v904, 15
    %v921 = vmul.u32 %v905, 15
    %v922 = vmul.u32 %v906, 15
    %v923 = vmul.u32 %v907, 15
    %v924 = vadd.s32 %v861, %v908
    %v925 = vadd.s32 %v863, %v909
    %v926 = vadd.s32 %v865, %v910
    %v927 = vadd.s32 %v867, %v911
    %v928 = vadd.s32 %v869, %v912
    %v929 = vadd.s32 %v871, %v913
    %v930 = vadd.s32 %v873, %v914
    %v931 = vadd.s32 %v875, %v915
    %v932 = vadd.s32 %v877, %v916
    %v933 = vadd.s32 %v879, %v917
    %v934 = vadd.s32 %v881, %v918
    %v935 = vadd.s32 %v883, %v919
    %v936 = vadd.s32 %v885, %v920
    %v937 = vadd.s32 %v887, %v921
    %v938 = vadd.s32 %v889, %v922
    %v939 = vadd.s32 %v891, %v923
    %v940 = vlaneseq
    %v941 = vand.u32 %v940, 127
    %v942 = vadd.s32 %v941, 128
    %v943 = vadd.s32 %v941, 256
    %v944 = vadd.s32 %v941, 384
    %v945 = vadd.s32 %v941, 512
    %v946 = vadd.s32 %v941, 640
    %v947 = vadd.s32 %v941, 768
    %v948 = vadd.s32 %v941, 896
    %v949 = vadd.s32 %v941, 1024
    %v950 = vadd.s32 %v941, 1152
    %v951 = vadd.s32 %v941, 1280
    %v952 = vadd.s32 %v941, 1408
    %v953 = vadd.s32 %v941, 1536
    %v954 = vadd.s32 %v941, 1664
    %v955 = vadd.s32 %v941, 1792
    %v956 = vadd.s32 %v941, 1920
    %s957 = sadd.s32 0, 0
    %s958 = smul.u32 %s957, 2048
    %v959 = vstv %s958
    %v960 = vadd.s32 %v959, %v941
    %v961 = vadd.s32 %v959, %v942
    %v962 = vadd.s32 %v959, %v943
    %v963 = vadd.s32 %v959, %v944
    %v964 = vadd.s32 %v959, %v945
    %v965 = vadd.s32 %v959, %v946
    %v966 = vadd.s32 %v959, %v947
    %v967 = vadd.s32 %v959, %v948
    %v968 = vadd.s32 %v959, %v949
    %v969 = vadd.s32 %v959, %v950
    %v970 = vadd.s32 %v959, %v951
    %v971 = vadd.s32 %v959, %v952
    %v972 = vadd.s32 %v959, %v953
    %v973 = vadd.s32 %v959, %v954
    %v974 = vadd.s32 %v959, %v955
    %v975 = vadd.s32 %v959, %v956
    %vm976 = vcmp.lt.s32.totalorder %v960, 2048
    %vm977 = vcmp.lt.s32.totalorder %v961, 2048
    %vm978 = vcmp.lt.s32.totalorder %v962, 2048
    %vm979 = vcmp.lt.s32.totalorder %v963, 2048
    %vm980 = vcmp.lt.s32.totalorder %v964, 2048
    %vm981 = vcmp.lt.s32.totalorder %v965, 2048
    %vm982 = vcmp.lt.s32.totalorder %v966, 2048
    %vm983 = vcmp.lt.s32.totalorder %v967, 2048
    %vm984 = vcmp.lt.s32.totalorder %v968, 2048
    %vm985 = vcmp.lt.s32.totalorder %v969, 2048
    %vm986 = vcmp.lt.s32.totalorder %v970, 2048
    %vm987 = vcmp.lt.s32.totalorder %v971, 2048
    %vm988 = vcmp.lt.s32.totalorder %v972, 2048
    %vm989 = vcmp.lt.s32.totalorder %v973, 2048
    %vm990 = vcmp.lt.s32.totalorder %v974, 2048
    %vm991 = vcmp.lt.s32.totalorder %v975, 2048
    %v992 = vsel %vm976, %v924, 30
    %v993 = vsel %vm977, %v925, 30
    %v994 = vsel %vm978, %v926, 30
    %v995 = vsel %vm979, %v927, 30
    %v996 = vsel %vm980, %v928, 30
    %v997 = vsel %vm981, %v929, 30
    %v998 = vsel %vm982, %v930, 30
    %v999 = vsel %vm983, %v931, 30
    %v1000 = vsel %vm984, %v932, 30
    %v1001 = vsel %vm985, %v933, 30
    %v1002 = vsel %vm986, %v934, 30
    %v1003 = vsel %vm987, %v935, 30
    %v1004 = vsel %vm988, %v936, 30
    %v1005 = vsel %vm989, %v937, 30
    %v1006 = vsel %vm990, %v938, 30
    %v1007 = vsel %vm991, %v939, 30
    %v1008 = vadd.s32 %v482, 16
    %v1009 = vadd.s32 %v482, 24
    %v1010 = vlaneseq
    %v1011 = vshrl.u32 %v1010, 7
    %v1012 = vsub.s32 0, %v1011
    %v1013 = vrot.slane %v992, %v1012
    %v1014 = vlaneseq
    %v1015 = vshrl.u32 %v1014, 7
    %v1016 = vsub.s32 0, %v1015
    %v1017 = vrot.slane %v993, %v1016
    %v1018 = vlaneseq
    %v1019 = vshrl.u32 %v1018, 7
    %v1020 = vsub.s32 0, %v1019
    %v1021 = vrot.slane %v994, %v1020
    %v1022 = vlaneseq
    %v1023 = vshrl.u32 %v1022, 7
    %v1024 = vsub.s32 0, %v1023
    %v1025 = vrot.slane %v995, %v1024
    %v1026 = vlaneseq
    %v1027 = vshrl.u32 %v1026, 7
    %v1028 = vsub.s32 0, %v1027
    %v1029 = vrot.slane %v996, %v1028
    %v1030 = vlaneseq
    %v1031 = vshrl.u32 %v1030, 7
    %v1032 = vsub.s32 0, %v1031
    %v1033 = vrot.slane %v997, %v1032
    %v1034 = vlaneseq
    %v1035 = vshrl.u32 %v1034, 7
    %v1036 = vsub.s32 0, %v1035
    %v1037 = vrot.slane %v998, %v1036
    %v1038 = vlaneseq
    %v1039 = vshrl.u32 %v1038, 7
    %v1040 = vsub.s32 0, %v1039
    %v1041 = vrot.slane %v999, %v1040
    %v1042 = vlaneseq
    %v1043 = vshrl.u32 %v1042, 7
    %v1044 = vsub.s32 0, %v1043
    %v1045 = vrot.slane %v1000, %v1044
    %v1046 = vlaneseq
    %v1047 = vshrl.u32 %v1046, 7
    %v1048 = vsub.s32 0, %v1047
    %v1049 = vrot.slane %v1001, %v1048
    %v1050 = vlaneseq
    %v1051 = vshrl.u32 %v1050, 7
    %v1052 = vsub.s32 0, %v1051
    %v1053 = vrot.slane %v1002, %v1052
    %v1054 = vlaneseq
    %v1055 = vshrl.u32 %v1054, 7
    %v1056 = vsub.s32 0, %v1055
    %v1057 = vrot.slane %v1003, %v1056
    %v1058 = vlaneseq
    %v1059 = vshrl.u32 %v1058, 7
    %v1060 = vsub.s32 0, %v1059
    %v1061 = vrot.slane %v1004, %v1060
    %v1062 = vlaneseq
    %v1063 = vshrl.u32 %v1062, 7
    %v1064 = vsub.s32 0, %v1063
    %v1065 = vrot.slane %v1005, %v1064
    %v1066 = vlaneseq
    %v1067 = vshrl.u32 %v1066, 7
    %v1068 = vsub.s32 0, %v1067
    %v1069 = vrot.slane %v1006, %v1068
    %v1070 = vlaneseq
    %v1071 = vshrl.u32 %v1070, 7
    %v1072 = vsub.s32 0, %v1071
    %v1073 = vrot.slane %v1007, %v1072
    %vm1074 = vcmp.eq.s32.totalorder %v482, %v1013
    %vm1075 = vcmp.eq.s32.totalorder %v482, %v1017
    %vm1076 = vcmp.eq.s32.totalorder %v482, %v1021
    %vm1077 = vcmp.eq.s32.totalorder %v482, %v1025
    %vm1078 = vcmp.eq.s32.totalorder %v482, %v1029
    %vm1079 = vcmp.eq.s32.totalorder %v482, %v1033
    %vm1080 = vcmp.eq.s32.totalorder %v482, %v1037
    %vm1081 = vcmp.eq.s32.totalorder %v482, %v1041
    %vm1082 = vcmp.eq.s32.totalorder %v482, %v1045
    %vm1083 = vcmp.eq.s32.totalorder %v482, %v1049
    %vm1084 = vcmp.eq.s32.totalorder %v482, %v1053
    %vm1085 = vcmp.eq.s32.totalorder %v482, %v1057
    %vm1086 = vcmp.eq.s32.totalorder %v482, %v1061
    %vm1087 = vcmp.eq.s32.totalorder %v482, %v1065
    %vm1088 = vcmp.eq.s32.totalorder %v482, %v1069
    %vm1089 = vcmp.eq.s32.totalorder %v482, %v1073
    %vm1090 = vcmp.eq.s32.totalorder %v483, %v1013
    %vm1091 = vcmp.eq.s32.totalorder %v483, %v1017
    %vm1092 = vcmp.eq.s32.totalorder %v483, %v1021
    %vm1093 = vcmp.eq.s32.totalorder %v483, %v1025
    %vm1094 = vcmp.eq.s32.totalorder %v483, %v1029
    %vm1095 = vcmp.eq.s32.totalorder %v483, %v1033
    %vm1096 = vcmp.eq.s32.totalorder %v483, %v1037
    %vm1097 = vcmp.eq.s32.totalorder %v483, %v1041
    %vm1098 = vcmp.eq.s32.totalorder %v483, %v1045
    %vm1099 = vcmp.eq.s32.totalorder %v483, %v1049
    %vm1100 = vcmp.eq.s32.totalorder %v483, %v1053
    %vm1101 = vcmp.eq.s32.totalorder %v483, %v1057
    %vm1102 = vcmp.eq.s32.totalorder %v483, %v1061
    %vm1103 = vcmp.eq.s32.totalorder %v483, %v1065
    %vm1104 = vcmp.eq.s32.totalorder %v483, %v1069
    %vm1105 = vcmp.eq.s32.totalorder %v483, %v1073
    %vm1106 = vcmp.eq.s32.totalorder %v1008, %v1013
    %vm1107 = vcmp.eq.s32.totalorder %v1008, %v1017
    %vm1108 = vcmp.eq.s32.totalorder %v1008, %v1021
    %vm1109 = vcmp.eq.s32.totalorder %v1008, %v1025
    %vm1110 = vcmp.eq.s32.totalorder %v1008, %v1029
    %vm1111 = vcmp.eq.s32.totalorder %v1008, %v1033
    %vm1112 = vcmp.eq.s32.totalorder %v1008, %v1037
    %vm1113 = vcmp.eq.s32.totalorder %v1008, %v1041
    %vm1114 = vcmp.eq.s32.totalorder %v1008, %v1045
    %vm1115 = vcmp.eq.s32.totalorder %v1008, %v1049
    %vm1116 = vcmp.eq.s32.totalorder %v1008, %v1053
    %vm1117 = vcmp.eq.s32.totalorder %v1008, %v1057
    %vm1118 = vcmp.eq.s32.totalorder %v1008, %v1061
    %vm1119 = vcmp.eq.s32.totalorder %v1008, %v1065
    %vm1120 = vcmp.eq.s32.totalorder %v1008, %v1069
    %vm1121 = vcmp.eq.s32.totalorder %v1008, %v1073
    %vm1122 = vcmp.eq.s32.totalorder %v1009, %v1013
    %vm1123 = vcmp.eq.s32.totalorder %v1009, %v1017
    %vm1124 = vcmp.eq.s32.totalorder %v1009, %v1021
    %vm1125 = vcmp.eq.s32.totalorder %v1009, %v1025
    %vm1126 = vcmp.eq.s32.totalorder %v1009, %v1029
    %vm1127 = vcmp.eq.s32.totalorder %v1009, %v1033
    %vm1128 = vcmp.eq.s32.totalorder %v1009, %v1037
    %vm1129 = vcmp.eq.s32.totalorder %v1009, %v1041
    %vm1130 = vcmp.eq.s32.totalorder %v1009, %v1045
    %vm1131 = vcmp.eq.s32.totalorder %v1009, %v1049
    %vm1132 = vcmp.eq.s32.totalorder %v1009, %v1053
    %vm1133 = vcmp.eq.s32.totalorder %v1009, %v1057
    %vm1134 = vcmp.eq.s32.totalorder %v1009, %v1061
    %vm1135 = vcmp.eq.s32.totalorder %v1009, %v1065
    %vm1136 = vcmp.eq.s32.totalorder %v1009, %v1069
    %vm1137 = vcmp.eq.s32.totalorder %v1009, %v1073
    %v1138 = vld [vmem:[#allocation7] sm:$0xff]
    %v1139 = vld [vmem:[#allocation7 + $0x8] sm:$0xff]
    %v1140 = vld [vmem:[#allocation7 + $0x10] sm:$0xff]
    %v1141 = vld [vmem:[#allocation7 + $0x18] sm:$0xff]
    %v1142 = vsel %vm1074, 1, 0
    %v1143 = vsel %vm1075, 1, 0
    %v1144 = vsel %vm1076, 1, 0
    %v1145 = vsel %vm1077, 1, 0
    %v1146 = vsel %vm1078, 1, 0
    %v1147 = vsel %vm1079, 1, 0
    %v1148 = vsel %vm1080, 1, 0
    %v1149 = vsel %vm1081, 1, 0
    %v1150 = vsel %vm1082, 1, 0
    %v1151 = vsel %vm1083, 1, 0
    %v1152 = vsel %vm1084, 1, 0
    %v1153 = vsel %vm1085, 1, 0
    %v1154 = vsel %vm1086, 1, 0
    %v1155 = vsel %vm1087, 1, 0
    %v1156 = vsel %vm1088, 1, 0
    %v1157 = vsel %vm1089, 1, 0
    %v1158 = vsel %vm1090, 1, 0
    %v1159 = vsel %vm1091, 1, 0
    %v1160 = vsel %vm1092, 1, 0
    %v1161 = vsel %vm1093, 1, 0
    %v1162 = vsel %vm1094, 1, 0
    %v1163 = vsel %vm1095, 1, 0
    %v1164 = vsel %vm1096, 1, 0
    %v1165 = vsel %vm1097, 1, 0
    %v1166 = vsel %vm1098, 1, 0
    %v1167 = vsel %vm1099, 1, 0
    %v1168 = vsel %vm1100, 1, 0
    %v1169 = vsel %vm1101, 1, 0
    %v1170 = vsel %vm1102, 1, 0
    %v1171 = vsel %vm1103, 1, 0
    %v1172 = vsel %vm1104, 1, 0
    %v1173 = vsel %vm1105, 1, 0
    %v1174 = vsel %vm1106, 1, 0
    %v1175 = vsel %vm1107, 1, 0
    %v1176 = vsel %vm1108, 1, 0
    %v1177 = vsel %vm1109, 1, 0
    %v1178 = vsel %vm1110, 1, 0
    %v1179 = vsel %vm1111, 1, 0
    %v1180 = vsel %vm1112, 1, 0
    %v1181 = vsel %vm1113, 1, 0
    %v1182 = vsel %vm1114, 1, 0
    %v1183 = vsel %vm1115, 1, 0
    %v1184 = vsel %vm1116, 1, 0
    %v1185 = vsel %vm1117, 1, 0
    %v1186 = vsel %vm1118, 1, 0
    %v1187 = vsel %vm1119, 1, 0
    %v1188 = vsel %vm1120, 1, 0
    %v1189 = vsel %vm1121, 1, 0
    %v1190 = vsel %vm1122, 1, 0
    %v1191 = vsel %vm1123, 1, 0
    %v1192 = vsel %vm1124, 1, 0
    %v1193 = vsel %vm1125, 1, 0
    %v1194 = vsel %vm1126, 1, 0
    %v1195 = vsel %vm1127, 1, 0
    %v1196 = vsel %vm1128, 1, 0
    %v1197 = vsel %vm1129, 1, 0
    %v1198 = vsel %vm1130, 1, 0
    %v1199 = vsel %vm1131, 1, 0
    %v1200 = vsel %vm1132, 1, 0
    %v1201 = vsel %vm1133, 1, 0
    %v1202 = vsel %vm1134, 1, 0
    %v1203 = vsel %vm1135, 1, 0
    %v1204 = vsel %vm1136, 1, 0
    %v1205 = vsel %vm1137, 1, 0
    %v1206 = vcvt.s32.f32 %v1142
    %v1207 = vcvt.s32.f32 %v1143
    %v1208 = vcvt.s32.f32 %v1144
    %v1209 = vcvt.s32.f32 %v1145
    %v1210 = vcvt.s32.f32 %v1146
    %v1211 = vcvt.s32.f32 %v1147
    %v1212 = vcvt.s32.f32 %v1148
    %v1213 = vcvt.s32.f32 %v1149
    %v1214 = vcvt.s32.f32 %v1150
    %v1215 = vcvt.s32.f32 %v1151
    %v1216 = vcvt.s32.f32 %v1152
    %v1217 = vcvt.s32.f32 %v1153
    %v1218 = vcvt.s32.f32 %v1154
    %v1219 = vcvt.s32.f32 %v1155
    %v1220 = vcvt.s32.f32 %v1156
    %v1221 = vcvt.s32.f32 %v1157
    %v1222 = vcvt.s32.f32 %v1158
    %v1223 = vcvt.s32.f32 %v1159
    %v1224 = vcvt.s32.f32 %v1160
    %v1225 = vcvt.s32.f32 %v1161
    %v1226 = vcvt.s32.f32 %v1162
    %v1227 = vcvt.s32.f32 %v1163
    %v1228 = vcvt.s32.f32 %v1164
    %v1229 = vcvt.s32.f32 %v1165
    %v1230 = vcvt.s32.f32 %v1166
    %v1231 = vcvt.s32.f32 %v1167
    %v1232 = vcvt.s32.f32 %v1168
    %v1233 = vcvt.s32.f32 %v1169
    %v1234 = vcvt.s32.f32 %v1170
    %v1235 = vcvt.s32.f32 %v1171
    %v1236 = vcvt.s32.f32 %v1172
    %v1237 = vcvt.s32.f32 %v1173
    %v1238 = vcvt.s32.f32 %v1174
    %v1239 = vcvt.s32.f32 %v1175
    %v1240 = vcvt.s32.f32 %v1176
    %v1241 = vcvt.s32.f32 %v1177
    %v1242 = vcvt.s32.f32 %v1178
    %v1243 = vcvt.s32.f32 %v1179
    %v1244 = vcvt.s32.f32 %v1180
    %v1245 = vcvt.s32.f32 %v1181
    %v1246 = vcvt.s32.f32 %v1182
    %v1247 = vcvt.s32.f32 %v1183
    %v1248 = vcvt.s32.f32 %v1184
    %v1249 = vcvt.s32.f32 %v1185
    %v1250 = vcvt.s32.f32 %v1186
    %v1251 = vcvt.s32.f32 %v1187
    %v1252 = vcvt.s32.f32 %v1188
    %v1253 = vcvt.s32.f32 %v1189
    %v1254 = vcvt.s32.f32 %v1190
    %v1255 = vcvt.s32.f32 %v1191
    %v1256 = vcvt.s32.f32 %v1192
    %v1257 = vcvt.s32.f32 %v1193
    %v1258 = vcvt.s32.f32 %v1194
    %v1259 = vcvt.s32.f32 %v1195
    %v1260 = vcvt.s32.f32 %v1196
    %v1261 = vcvt.s32.f32 %v1197
    %v1262 = vcvt.s32.f32 %v1198
    %v1263 = vcvt.s32.f32 %v1199
    %v1264 = vcvt.s32.f32 %v1200
    %v1265 = vcvt.s32.f32 %v1201
    %v1266 = vcvt.s32.f32 %v1202
    %v1267 = vcvt.s32.f32 %v1203
    %v1268 = vcvt.s32.f32 %v1204
    %v1269 = vcvt.s32.f32 %v1205
    %v1270 = vadd.f32 %v1206, %v1207
    %v1271 = vadd.f32 %v1270, %v1208
    %v1272 = vadd.f32 %v1271, %v1209
    %v1273 = vadd.f32 %v1272, %v1210
    %v1274 = vadd.f32 %v1273, %v1211
    %v1275 = vadd.f32 %v1274, %v1212
    %v1276 = vadd.f32 %v1275, %v1213
    %v1277 = vadd.f32 %v1276, %v1214
    %v1278 = vadd.f32 %v1277, %v1215
    %v1279 = vadd.f32 %v1278, %v1216
    %v1280 = vadd.f32 %v1279, %v1217
    %v1281 = vadd.f32 %v1280, %v1218
    %v1282 = vadd.f32 %v1281, %v1219
    %v1283 = vadd.f32 %v1282, %v1220
    %v1284 = vadd.f32 %v1283, %v1221
    %1285 = vadd.xlane.f32.xlu0 %v1284
    %v1286 = vpop.xlane.xlu0 %1285
    %v1287 = vadd.f32 %v1222, %v1223
    %v1288 = vadd.f32 %v1287, %v1224
    %v1289 = vadd.f32 %v1288, %v1225
    %v1290 = vadd.f32 %v1289, %v1226
    %v1291 = vadd.f32 %v1290, %v1227
    %v1292 = vadd.f32 %v1291, %v1228
    %v1293 = vadd.f32 %v1292, %v1229
    %v1294 = vadd.f32 %v1293, %v1230
    %v1295 = vadd.f32 %v1294, %v1231
    %v1296 = vadd.f32 %v1295, %v1232
    %v1297 = vadd.f32 %v1296, %v1233
    %v1298 = vadd.f32 %v1297, %v1234
    %v1299 = vadd.f32 %v1298, %v1235
    %v1300 = vadd.f32 %v1299, %v1236
    %v1301 = vadd.f32 %v1300, %v1237
    %1302 = vadd.xlane.f32.xlu0 %v1301
    %v1303 = vpop.xlane.xlu0 %1302
    %v1304 = vadd.f32 %v1238, %v1239
    %v1305 = vadd.f32 %v1304, %v1240
    %v1306 = vadd.f32 %v1305, %v1241
    %v1307 = vadd.f32 %v1306, %v1242
    %v1308 = vadd.f32 %v1307, %v1243
    %v1309 = vadd.f32 %v1308, %v1244
    %v1310 = vadd.f32 %v1309, %v1245
    %v1311 = vadd.f32 %v1310, %v1246
    %v1312 = vadd.f32 %v1311, %v1247
    %v1313 = vadd.f32 %v1312, %v1248
    %v1314 = vadd.f32 %v1313, %v1249
    %v1315 = vadd.f32 %v1314, %v1250
    %v1316 = vadd.f32 %v1315, %v1251
    %v1317 = vadd.f32 %v1316, %v1252
    %v1318 = vadd.f32 %v1317, %v1253
    %1319 = vadd.xlane.f32.xlu0 %v1318
    %v1320 = vpop.xlane.xlu0 %1319
    %v1321 = vadd.f32 %v1254, %v1255
    %v1322 = vadd.f32 %v1321, %v1256
    %v1323 = vadd.f32 %v1322, %v1257
    %v1324 = vadd.f32 %v1323, %v1258
    %v1325 = vadd.f32 %v1324, %v1259
    %v1326 = vadd.f32 %v1325, %v1260
    %v1327 = vadd.f32 %v1326, %v1261
    %v1328 = vadd.f32 %v1327, %v1262
    %v1329 = vadd.f32 %v1328, %v1263
    %v1330 = vadd.f32 %v1329, %v1264
    %v1331 = vadd.f32 %v1330, %v1265
    %v1332 = vadd.f32 %v1331, %v1266
    %v1333 = vadd.f32 %v1332, %v1267
    %v1334 = vadd.f32 %v1333, %v1268
    %v1335 = vadd.f32 %v1334, %v1269
    %1336 = vadd.xlane.f32.xlu0 %v1335
    %v1337 = vpop.xlane.xlu0 %1336
    %v1338 = vadd.f32 %v1138, %v1286
    %v1339 = vadd.f32 %v1139, %v1303
    %v1340 = vadd.f32 %v1140, %v1320
    %v1341 = vadd.f32 %v1141, %v1337
    %1342 = vst [vmem:[#allocation7] sm:$0xff] %v1338
    %1343 = vst [vmem:[#allocation7 + $0x8] sm:$0xff] %v1339
    %1344 = vst [vmem:[#allocation7 + $0x10] sm:$0xff] %v1340
    %1345 = vst [vmem:[#allocation7 + $0x18] sm:$0xff] %v1341
    %v1346 = vld [vmem:[#allocation8] sm:$0xff]
    %v1347 = vld [vmem:[#allocation8 + $0x8] sm:$0xff]
    %v1348 = vld [vmem:[#allocation8 + $0x10] sm:$0xff]
    %v1349 = vld [vmem:[#allocation8 + $0x18] sm:$0xff]
    %v1350 = vsel %vm1074, %v465, 0.0
    %v1351 = vsel %vm1075, %v466, 0.0
    %v1352 = vsel %vm1076, %v467, 0.0
    %v1353 = vsel %vm1077, %v468, 0.0
    %v1354 = vsel %vm1078, %v469, 0.0
    %v1355 = vsel %vm1079, %v470, 0.0
    %v1356 = vsel %vm1080, %v471, 0.0
    %v1357 = vsel %vm1081, %v472, 0.0
    %v1358 = vsel %vm1082, %v473, 0.0
    %v1359 = vsel %vm1083, %v474, 0.0
    %v1360 = vsel %vm1084, %v475, 0.0
    %v1361 = vsel %vm1085, %v476, 0.0
    %v1362 = vsel %vm1086, %v477, 0.0
    %v1363 = vsel %vm1087, %v478, 0.0
    %v1364 = vsel %vm1088, %v479, 0.0
    %v1365 = vsel %vm1089, %v480, 0.0
    %v1366 = vsel %vm1090, %v465, 0.0
    %v1367 = vsel %vm1091, %v466, 0.0
    %v1368 = vsel %vm1092, %v467, 0.0
    %v1369 = vsel %vm1093, %v468, 0.0
    %v1370 = vsel %vm1094, %v469, 0.0
    %v1371 = vsel %vm1095, %v470, 0.0
    %v1372 = vsel %vm1096, %v471, 0.0
    %v1373 = vsel %vm1097, %v472, 0.0
    %v1374 = vsel %vm1098, %v473, 0.0
    %v1375 = vsel %vm1099, %v474, 0.0
    %v1376 = vsel %vm1100, %v475, 0.0
    %v1377 = vsel %vm1101, %v476, 0.0
    %v1378 = vsel %vm1102, %v477, 0.0
    %v1379 = vsel %vm1103, %v478, 0.0
    %v1380 = vsel %vm1104, %v479, 0.0
    %v1381 = vsel %vm1105, %v480, 0.0
    %v1382 = vsel %vm1106, %v465, 0.0
    %v1383 = vsel %vm1107, %v466, 0.0
    %v1384 = vsel %vm1108, %v467, 0.0
    %v1385 = vsel %vm1109, %v468, 0.0
    %v1386 = vsel %vm1110, %v469, 0.0
    %v1387 = vsel %vm1111, %v470, 0.0
    %v1388 = vsel %vm1112, %v471, 0.0
    %v1389 = vsel %vm1113, %v472, 0.0
    %v1390 = vsel %vm1114, %v473, 0.0
    %v1391 = vsel %vm1115, %v474, 0.0
    %v1392 = vsel %vm1116, %v475, 0.0
    %v1393 = vsel %vm1117, %v476, 0.0
    %v1394 = vsel %vm1118, %v477, 0.0
    %v1395 = vsel %vm1119, %v478, 0.0
    %v1396 = vsel %vm1120, %v479, 0.0
    %v1397 = vsel %vm1121, %v480, 0.0
    %v1398 = vsel %vm1122, %v465, 0.0
    %v1399 = vsel %vm1123, %v466, 0.0
    %v1400 = vsel %vm1124, %v467, 0.0
    %v1401 = vsel %vm1125, %v468, 0.0
    %v1402 = vsel %vm1126, %v469, 0.0
    %v1403 = vsel %vm1127, %v470, 0.0
    %v1404 = vsel %vm1128, %v471, 0.0
    %v1405 = vsel %vm1129, %v472, 0.0
    %v1406 = vsel %vm1130, %v473, 0.0
    %v1407 = vsel %vm1131, %v474, 0.0
    %v1408 = vsel %vm1132, %v475, 0.0
    %v1409 = vsel %vm1133, %v476, 0.0
    %v1410 = vsel %vm1134, %v477, 0.0
    %v1411 = vsel %vm1135, %v478, 0.0
    %v1412 = vsel %vm1136, %v479, 0.0
    %v1413 = vsel %vm1137, %v480, 0.0
    %v1414 = vadd.f32 %v1350, %v1351
    %v1415 = vadd.f32 %v1414, %v1352
    %v1416 = vadd.f32 %v1415, %v1353
    %v1417 = vadd.f32 %v1416, %v1354
    %v1418 = vadd.f32 %v1417, %v1355
    %v1419 = vadd.f32 %v1418, %v1356
    %v1420 = vadd.f32 %v1419, %v1357
    %v1421 = vadd.f32 %v1420, %v1358
    %v1422 = vadd.f32 %v1421, %v1359
    %v1423 = vadd.f32 %v1422, %v1360
    %v1424 = vadd.f32 %v1423, %v1361
    %v1425 = vadd.f32 %v1424, %v1362
    %v1426 = vadd.f32 %v1425, %v1363
    %v1427 = vadd.f32 %v1426, %v1364
    %v1428 = vadd.f32 %v1427, %v1365
    %1429 = vadd.xlane.f32.xlu0 %v1428
    %v1430 = vpop.xlane.xlu0 %1429
    %v1431 = vadd.f32 %v1366, %v1367
    %v1432 = vadd.f32 %v1431, %v1368
    %v1433 = vadd.f32 %v1432, %v1369
    %v1434 = vadd.f32 %v1433, %v1370
    %v1435 = vadd.f32 %v1434, %v1371
    %v1436 = vadd.f32 %v1435, %v1372
    %v1437 = vadd.f32 %v1436, %v1373
    %v1438 = vadd.f32 %v1437, %v1374
    %v1439 = vadd.f32 %v1438, %v1375
    %v1440 = vadd.f32 %v1439, %v1376
    %v1441 = vadd.f32 %v1440, %v1377
    %v1442 = vadd.f32 %v1441, %v1378
    %v1443 = vadd.f32 %v1442, %v1379
    %v1444 = vadd.f32 %v1443, %v1380
    %v1445 = vadd.f32 %v1444, %v1381
    %1446 = vadd.xlane.f32.xlu0 %v1445
    %v1447 = vpop.xlane.xlu0 %1446
    %v1448 = vadd.f32 %v1382, %v1383
    %v1449 = vadd.f32 %v1448, %v1384
    %v1450 = vadd.f32 %v1449, %v1385
    %v1451 = vadd.f32 %v1450, %v1386
    %v1452 = vadd.f32 %v1451, %v1387
    %v1453 = vadd.f32 %v1452, %v1388
    %v1454 = vadd.f32 %v1453, %v1389
    %v1455 = vadd.f32 %v1454, %v1390
    %v1456 = vadd.f32 %v1455, %v1391
    %v1457 = vadd.f32 %v1456, %v1392
    %v1458 = vadd.f32 %v1457, %v1393
    %v1459 = vadd.f32 %v1458, %v1394
    %v1460 = vadd.f32 %v1459, %v1395
    %v1461 = vadd.f32 %v1460, %v1396
    %v1462 = vadd.f32 %v1461, %v1397
    %1463 = vadd.xlane.f32.xlu0 %v1462
    %v1464 = vpop.xlane.xlu0 %1463
    %v1465 = vadd.f32 %v1398, %v1399
    %v1466 = vadd.f32 %v1465, %v1400
    %v1467 = vadd.f32 %v1466, %v1401
    %v1468 = vadd.f32 %v1467, %v1402
    %v1469 = vadd.f32 %v1468, %v1403
    %v1470 = vadd.f32 %v1469, %v1404
    %v1471 = vadd.f32 %v1470, %v1405
    %v1472 = vadd.f32 %v1471, %v1406
    %v1473 = vadd.f32 %v1472, %v1407
    %v1474 = vadd.f32 %v1473, %v1408
    %v1475 = vadd.f32 %v1474, %v1409
    %v1476 = vadd.f32 %v1475, %v1410
    %v1477 = vadd.f32 %v1476, %v1411
    %v1478 = vadd.f32 %v1477, %v1412
    %v1479 = vadd.f32 %v1478, %v1413
    %1480 = vadd.xlane.f32.xlu0 %v1479
    %v1481 = vpop.xlane.xlu0 %1480
    %v1482 = vadd.f32 %v1346, %v1430
    %v1483 = vadd.f32 %v1347, %v1447
    %v1484 = vadd.f32 %v1348, %v1464
    %v1485 = vadd.f32 %v1349, %v1481
    %1486 = vst [vmem:[#allocation8] sm:$0xff] %v1482
    %1487 = vst [vmem:[#allocation8 + $0x8] sm:$0xff] %v1483
    %1488 = vst [vmem:[#allocation8 + $0x10] sm:$0xff] %v1484
    %1489 = vst [vmem:[#allocation8 + $0x18] sm:$0xff] %v1485
    // Predicated region
    $region22: #{tpu_custom_call.1} parent=1 // pred_check
      _
    $region23: #{tpu_custom_call.1} parent=1 // pred_check_branch
      %1491 = sbr.rel (0) target = $region25
    $region24: #{tpu_custom_call.1} parent=1 // pred_region
      %s1493 = ssub.s32 512, 512
      %1494 = vsyncadd [#allocation4], %s1493
      %s1495 = sshll.u32 [#allocation7], 4
      %s1496 = int_to_ptr.vmem [resolvable:$true] %s1495
      %1501 = dma.vmem_to_hbm [thread:$0]  %s1496, 512, %s2, [#allocation4], 128, 128, 8
    $region25: #{tpu_custom_call.1} parent=1 // pred_fallthru
      _
    // Predicated region
    $region26: #{tpu_custom_call.1} parent=1 // pred_check
      _
    $region27: #{tpu_custom_call.1} parent=1 // pred_check_branch
      %1503 = sbr.rel (0) target = $region29
    $region28: #{tpu_custom_call.1} parent=1 // pred_region
      %s1505 = ssub.s32 512, 512
      %1506 = vsyncadd [#allocation9], %s1505
      %s1507 = sshll.u32 [#allocation8], 4
      %s1508 = int_to_ptr.vmem [resolvable:$true] %s1507
      %1513 = dma.vmem_to_hbm [thread:$0]  %s1508, 512, %s3, [#allocation9], 128, 128, 8
    $region29: #{tpu_custom_call.1} parent=1 // pred_fallthru
      _
    // Predicated region
    $region30: #{tpu_custom_call.1} parent=1 // pred_check
      _
    $region31: #{tpu_custom_call.1} parent=1 // pred_check_branch
      %1515 = sbr.rel (0) target = $region33
    $region32: #{tpu_custom_call.1} parent=1 // pred_region
      %1516 = dma.done [#allocation4], 512
    $region33: #{tpu_custom_call.1} parent=1 // pred_fallthru
      _
    // Predicated region
    $region34: #{tpu_custom_call.1} parent=1 // pred_check
      _
    $region35: #{tpu_custom_call.1} parent=1 // pred_check_branch
      %1518 = sbr.rel (0) target = $region37
    $region36: #{tpu_custom_call.1} parent=1 // pred_region
      %1519 = dma.done [#allocation9], 512
    $region37: #{tpu_custom_call.1} parent=1 // pred_fallthru
      _
    %1520 = vsyncpa [#allocation3], 1
    %1521 = vsyncpa [#allocation6], 1
    %1522 = vsyncpa [#allocation4], 1
    %1523 = vsyncpa [#allocation9], 1

</llo_original>
